<compile_context>
chip_gen: v7x
topology: tpu7x:2x2x1
jax: 0.10.0
libtpu: 0.0.40
codegen_flags: <defaults>
</compile_context>

<pallas_src>
import functools

import jax
import jax.numpy as jnp
from jax.experimental import pallas as pl
from jax.experimental.pallas import tpu as pltpu

EPS = 1e-5
LANE = 128
SUB = 8
HIGHEST = jax.lax.Precision.HIGHEST


def _round_up(n, m):
    return (n + m - 1) // m * m


def _vmem_capacity_bytes():
    try:
        return int(pltpu.get_tpu_info().vmem_capacity_bytes)
    except Exception:
        return 64 * (1 << 20)      # conservative: v7x per-TensorCore capacity


def _mosaic_params(per_step_bytes, resident_bytes):
    """Generation-aware VMEM budget: double-buffered per-step blocks + resident
    weights/scratch, with headroom, clamped to <45% of physical VMEM."""
    cap = _vmem_capacity_bytes()
    need = 2 * int(per_step_bytes) + int(resident_bytes) + (1 << 20)
    limit = int(min(0.45 * cap, max(24 << 20, 2 * need)))
    return pltpu.CompilerParams(dimension_semantics=("parallel",),
                                vmem_limit_bytes=limit)


# ---------------------------------------------------------------------------
# In-kernel helpers
# ---------------------------------------------------------------------------
def _zero_pad_rows(a, l_valid):
    """Zero rows >= l_valid of a [Lp, C] f32 array (no-op when Lp == l_valid)."""
    lp = a.shape[0]
    if l_valid == lp:
        return a
    rid = jax.lax.broadcasted_iota(jnp.int32, (lp, 1), 0)
    return jnp.where(rid < l_valid, a, 0.0)


def _stats(a):
    """Per-channel partial (sum, sumsq) of a masked [Lp, C] f32 tile -> [2, C]."""
    return jnp.concatenate([jnp.sum(a, axis=0, keepdims=True),
                            jnp.sum(a * a, axis=0, keepdims=True)], axis=0)


# ---------------------------------------------------------------------------
# Stage 1: conv1 (+ projection shortcut) + partial BN statistics
# ---------------------------------------------------------------------------
def _stage1_kernel(s, l_out, lp_out, has_proj, x_ref, w1_ref, *rest):
    if has_proj:
        ws_ref, y1_ref, st1_ref, sc_ref, sts_ref = rest
    else:
        y1_ref, st1_ref = rest
    coutp = y1_ref.shape[2]

    # conv1 (k=3, stride=s, pad=1): three per-tap MXU matmuls, f32 accumulation.
    x_center = None
    acc = jnp.zeros((lp_out, coutp), jnp.float32)
    for k in range(3):
        p, r0 = k % s, k // s
        xk = x_ref[0, p, r0:r0 + lp_out, :]                 # [Lp_out, Cin_p] bf16
        if k == 1:
            x_center = xk                                    # reused by the 1x1 shortcut
        acc += jnp.dot(xk, w1_ref[k], preferred_element_type=jnp.float32)
    acc = _zero_pad_rows(acc, l_out)
    y1_ref[0] = acc.astype(jnp.bfloat16)
    st1_ref[0] = _stats(acc)

    if has_proj:
        sc = jnp.dot(x_center, ws_ref[...], preferred_element_type=jnp.float32)
        sc = _zero_pad_rows(sc, l_out)
        sc_ref[0] = sc.astype(jnp.bfloat16)
        sts_ref[0] = _stats(sc)


# ---------------------------------------------------------------------------
# Stage 2: bn1 + relu + conv2 + partial BN statistics
# ---------------------------------------------------------------------------
def _stage2_kernel(l_out, lp_out, y1_ref, a1_ref, w2_ref, y2_ref, st2_ref, zbuf):
    coutp = y1_ref.shape[2]

    # bn1 folded into a per-channel scale/bias FMA (f32 on the VPU) + relu.
    z = jnp.maximum(y1_ref[0].astype(jnp.float32) * a1_ref[0:1, :]
                    + a1_ref[1:2, :], 0.0)
    z = _zero_pad_rows(z, l_out)

    # Stage into a zero-bordered scratch: rows [8, 8+Lp_out) hold z (aligned
    # store); border rows are re-zeroed every step (megacore-safe).
    zbuf[0:SUB, :] = jnp.zeros((SUB, coutp), jnp.bfloat16)
    zbuf[lp_out + SUB:lp_out + 2 * SUB, :] = jnp.zeros((SUB, coutp), jnp.bfloat16)
    zbuf[SUB:SUB + lp_out, :] = z.astype(jnp.bfloat16)

    # conv2 (k=3, stride=1, pad=1): tap k reads rows [7+k, 7+k+Lp_out).
    acc = jnp.zeros((lp_out, coutp), jnp.float32)
    for k in range(3):
        r0 = SUB - 1 + k
        acc += jnp.dot(zbuf[r0:r0 + lp_out, :], w2_ref[k],
                       preferred_element_type=jnp.float32)
    acc = _zero_pad_rows(acc, l_out)
    y2_ref[0] = acc.astype(jnp.bfloat16)
    st2_ref[0] = _stats(acc)


# ---------------------------------------------------------------------------
# Stage 3: bn2 (+ shortcut bn) + residual add + relu
# ---------------------------------------------------------------------------
def _stage3_kernel(l_out, lp_out, has_proj, y2_ref, sc_or_x_ref, a2_ref, *rest):
    if has_proj:
        as_ref, out_ref = rest
    else:
        (out_ref,) = rest
    y = y2_ref[0].astype(jnp.float32) * a2_ref[0:1, :] + a2_ref[1:2, :]
    if has_proj:
        sc = sc_or_x_ref[0].astype(jnp.float32) * as_ref[0:1, :] + as_ref[1:2, :]
    else:
        # identity shortcut: center tap of the (stride=1) polyphase input.
        sc = sc_or_x_ref[0, 0, 1:1 + lp_out, :].astype(jnp.float32)
    o = _zero_pad_rows(jnp.maximum(y + sc, 0.0), l_out)
    out_ref[0] = o.astype(jnp.bfloat16)


# ---------------------------------------------------------------------------
# BN finalize (tiny per-channel vectors; plain JAX between the pallas calls)
# ---------------------------------------------------------------------------
def _bn_fold(stats, gamma_p, beta_p, n_valid):
    """stats [B, 2, Cp] partial (sum, sumsq) -> folded [2, Cp] (scale, bias)."""
    tot = jnp.sum(stats, axis=0)
    mean = tot[0] / n_valid
    var = jnp.maximum(tot[1] / n_valid - mean * mean, 0.0)   # guard cancellation
    scale = gamma_p * jax.lax.rsqrt(var + EPS)
    bias = beta_p - mean * scale
    # NOTE: mean/var here are exactly the PyTorch batch statistics; running
    # buffer updates could be derived from them.  TODO(synk): expose them.
    return jnp.stack([scale, bias], axis=0)


# ---------------------------------------------------------------------------
# Parameter layout prep (PyTorch tensors -> kernel layouts)
# ---------------------------------------------------------------------------
def _prep_params(params, c_in, planes, stride):
    cin_p = _round_up(c_in, LANE)
    cout_p = _round_up(planes, LANE)
    has_proj = (stride != 1) or (c_in != planes)

    def conv_w(w, cp):                       # [Cout, Cin, K] -> [K, cp, Cout_p] bf16
        wt = jnp.transpose(w, (2, 1, 0))
        wt = jnp.pad(wt, ((0, 0), (0, cp - w.shape[1]), (0, cout_p - w.shape[0])))
        return wt.astype(jnp.bfloat16)

    def vec(v):                              # zero-fill padded channels
        return jnp.pad(v, (0, cout_p - v.shape[0])).astype(jnp.float32)

    pp = dict(w1=conv_w(params['w1'], cin_p),
              w2=conv_w(params['w2'], cout_p),
              g1=vec(params['g1']), b1=vec(params['b1']),
              g2=vec(params['g2']), b2=vec(params['b2']))
    if has_proj:
        pp['ws'] = conv_w(params['ws'], cin_p)[0]            # [Cin_p, Cout_p]
        pp['gs'] = vec(params['gs'])
        pp['bs'] = vec(params['bs'])
    return pp, cin_p, cout_p, has_proj


# ---------------------------------------------------------------------------
# The block on the padded bf16 NLC layout (chained blocks should call this)
# ---------------------------------------------------------------------------
def _basic_block_padded(x_nlc_p, pp, stride, l_out, cin_p, cout_p, has_proj):
    """x_nlc_p: [B, L, Cin_p] bf16 (channel-padded NLC; rows beyond the valid
    length, if any, must be zero).  Returns [B, Lp_out, Cout_p] bf16 with
    rows >= l_out and padded channels exactly zero."""
    b = x_nlc_p.shape[0]
    s = int(stride)
    lp_out = _round_up(l_out, SUB)
    rows_p = lp_out + SUB
    pad_len = s * rows_p

    # Zero-pad the length axis (conv pad=1 on the left, rest on the right) and
    # split into `s` polyphases so every conv tap is a contiguous static slice.
    x_pad = jnp.pad(x_nlc_p, ((0, 0), (1, pad_len - 1 - x_nlc_p.shape[1]), (0, 0)))
    x_ph = jnp.transpose(x_pad.reshape(b, rows_p, s, cin_p), (0, 2, 1, 3))
    # x_ph: [B, s, rows_p, Cin_p] bf16;  x_ph[b, p, r] == x_pad[b, s*r + p]

    n_valid = float(b * l_out)

    # Block specs (grid over batch; weights/BN params resident via constant maps)
    x_spec = pl.BlockSpec((1, s, rows_p, cin_p), lambda i: (i, 0, 0, 0))
    w1_spec = pl.BlockSpec((3, cin_p, cout_p), lambda i: (0, 0, 0))
    w2_spec = pl.BlockSpec((3, cout_p, cout_p), lambda i: (0, 0, 0))
    act_spec = pl.BlockSpec((1, lp_out, cout_p), lambda i: (i, 0, 0))
    st_spec = pl.BlockSpec((1, 2, cout_p), lambda i: (i, 0, 0))
    bn_spec = pl.BlockSpec((2, cout_p), lambda i: (0, 0))

    act_shape = jax.ShapeDtypeStruct((b, lp_out, cout_p), jnp.bfloat16)
    st_shape = jax.ShapeDtypeStruct((b, 2, cout_p), jnp.float32)

    x_bytes = s * rows_p * cin_p * 2
    act_bytes = lp_out * cout_p * 2
    st_bytes = 2 * cout_p * 4
    w1_bytes = 3 * cin_p * cout_p * 2
    w2_bytes = 3 * cout_p * cout_p * 2
    ws_bytes = cin_p * cout_p * 2 if has_proj else 0
    f32_tile = lp_out * cout_p * 4

    # ---- stage 1: conv1 (+ projection) + partial stats ----------------------
    if has_proj:
        ws_spec = pl.BlockSpec((cin_p, cout_p), lambda i: (0, 0))
        y1, st1, sc, sts = pl.pallas_call(
            functools.partial(_stage1_kernel, s, l_out, lp_out, True),
            grid=(b,),
            in_specs=[x_spec, w1_spec, ws_spec],
            out_specs=(act_spec, st_spec, act_spec, st_spec),
            out_shape=(act_shape, st_shape, act_shape, st_shape),
            compiler_params=_mosaic_params(
                x_bytes + 2 * act_bytes + 2 * st_bytes + 3 * f32_tile,
                w1_bytes + ws_bytes),
            cost_estimate=pl.CostEstimate(
                flops=int(2 * b * l_out * cin_p * cout_p * 4),
                transcendentals=0,
                bytes_accessed=int(b * (x_bytes + 2 * act_bytes + 2 * st_bytes)
                                   + w1_bytes + ws_bytes)),
        )(x_ph, pp['w1'], pp['ws'])
    else:
        y1, st1 = pl.pallas_call(
            functools.partial(_stage1_kernel, s, l_out, lp_out, False),
            grid=(b,),
            in_specs=[x_spec, w1_spec],
            out_specs=(act_spec, st_spec),
            out_shape=(act_shape, st_shape),
            compiler_params=_mosaic_params(
                x_bytes + act_bytes + st_bytes + 2 * f32_tile, w1_bytes),
            cost_estimate=pl.CostEstimate(
                flops=int(2 * b * l_out * cin_p * cout_p * 3),
                transcendentals=0,
                bytes_accessed=int(b * (x_bytes + act_bytes + st_bytes) + w1_bytes)),
        )(x_ph, pp['w1'])
        sc, sts = None, None

    a1 = _bn_fold(st1, pp['g1'], pp['b1'], n_valid)

    # ---- stage 2: bn1 + relu + conv2 + partial stats -------------------------
    y2, st2 = pl.pallas_call(
        functools.partial(_stage2_kernel, l_out, lp_out),
        grid=(b,),
        in_specs=[act_spec, bn_spec, w2_spec],
        out_specs=(act_spec, st_spec),
        out_shape=(act_shape, st_shape),
        scratch_shapes=[pltpu.VMEM((lp_out + 2 * SUB, cout_p), jnp.bfloat16)],
        compiler_params=_mosaic_params(
            2 * act_bytes + st_bytes + 2 * cout_p * 4 + 2 * f32_tile,
            w2_bytes + (lp_out + 2 * SUB) * cout_p * 2),
        cost_estimate=pl.CostEstimate(
            flops=int(2 * b * l_out * cout_p * cout_p * 3),
            transcendentals=0,
            bytes_accessed=int(b * (2 * act_bytes + st_bytes) + w2_bytes)),
    )(y1, a1, pp['w2'])

    a2 = _bn_fold(st2, pp['g2'], pp['b2'], n_valid)

    # ---- stage 3: bn2 (+ shortcut bn) + add + relu ---------------------------
    out_shape = jax.ShapeDtypeStruct((b, lp_out, cout_p), jnp.bfloat16)
    if has_proj:
        a_s = _bn_fold(sts, pp['gs'], pp['bs'], n_valid)
        out = pl.pallas_call(
            functools.partial(_stage3_kernel, l_out, lp_out, True),
            grid=(b,),
            in_specs=[act_spec, act_spec, bn_spec, bn_spec],
            out_specs=act_spec,
            out_shape=out_shape,
            compiler_params=_mosaic_params(
                3 * act_bytes + 4 * cout_p * 4 + 3 * f32_tile, 0),
            cost_estimate=pl.CostEstimate(
                flops=int(6 * b * lp_out * cout_p), transcendentals=0,
                bytes_accessed=int(3 * b * act_bytes)),
        )(y2, sc, a2, a_s)
    else:
        out = pl.pallas_call(
            functools.partial(_stage3_kernel, l_out, lp_out, False),
            grid=(b,),
            in_specs=[act_spec, x_spec, bn_spec],
            out_specs=act_spec,
            out_shape=out_shape,
            compiler_params=_mosaic_params(
                2 * act_bytes + x_bytes + 2 * cout_p * 4 + 3 * f32_tile, 0),
            cost_estimate=pl.CostEstimate(
                flops=int(4 * b * lp_out * cout_p), transcendentals=0,
                bytes_accessed=int(b * (2 * act_bytes + x_bytes))),
        )(y2, x_ph, a2)
    return out


# ---------------------------------------------------------------------------
# PyTorch-compatible NCL wrapper (layout plumbing only; used by the test)
# ---------------------------------------------------------------------------
def basic_block_forward(x, params, stride):
    """x: [B, Cin, L] f32 (PyTorch NCL) -> [B, planes, Lout] f32."""
    b, c_in, l = x.shape
    planes = params['w1'].shape[0]
    s = int(stride)
    l_out = (l - 1) // s + 1
    pp, cin_p, cout_p, has_proj = _prep_params(params, c_in, planes, s)

    x_nlc = jnp.transpose(x, (0, 2, 1)).astype(jnp.bfloat16)
    x_nlc_p = jnp.pad(x_nlc, ((0, 0), (0, 0), (0, cin_p - c_in)))
    out_p = _basic_block_padded(x_nlc_p, pp, s, l_out, cin_p, cout_p, has_proj)
    return jnp.transpose(out_p[:, :l_out, :planes].astype(jnp.float32), (0, 2, 1))


# ---------------------------------------------------------------------------
# Pure-JAX reference (f32, HIGHEST) for the correctness assert
# ---------------------------------------------------------------------------
def basic_block_reference(x, params, stride):
    def conv1d(v, w, s, pad):
        return jax.lax.conv_general_dilated(
            v, w, (s,), [(pad, pad)],
            dimension_numbers=('NCH', 'OIH', 'NCH'), precision=HIGHEST)

    def bn(y, g, bta):
        mean = jnp.mean(y, axis=(0, 2), keepdims=True)
        var = jnp.mean(jnp.square(y - mean), axis=(0, 2), keepdims=True)
        return (y - mean) * jax.lax.rsqrt(var + EPS) * g.reshape(1, -1, 1) \
            + bta.reshape(1, -1, 1)

    planes = params['w1'].shape[0]
    out = jax.nn.relu(bn(conv1d(x, params['w1'], stride, 1), params['g1'], params['b1']))
    out = bn(conv1d(out, params['w2'], 1, 1), params['g2'], params['b2'])
    if stride != 1 or x.shape[1] != planes:
        sc = bn(conv1d(x, params['ws'], stride, 0), params['gs'], params['bs'])
    else:
        sc = x
    return jax.nn.relu(out + sc)


def init_params(key, in_planes, planes, stride):
    k1, k2, k3 = jax.random.split(key, 3)
    p = {
        'w1': jax.random.normal(k1, (planes, in_planes, 3), jnp.float32)
              * (2.0 / (in_planes * 3)) ** 0.5,
        'g1': jnp.ones((planes,), jnp.float32),
        'b1': jnp.zeros((planes,), jnp.float32),
        'w2': jax.random.normal(k2, (planes, planes, 3), jnp.float32)
              * (2.0 / (planes * 3)) ** 0.5,
        'g2': jnp.ones((planes,), jnp.float32),
        'b2': jnp.zeros((planes,), jnp.float32),
    }
    if stride != 1 or in_planes != planes:
        p['ws'] = jax.random.normal(k3, (planes, in_planes, 1), jnp.float32) \
                  * (2.0 / in_planes) ** 0.5
        p['gs'] = jnp.ones((planes,), jnp.float32)
        p['bs'] = jnp.zeros((planes,), jnp.float32)
    return p


if __name__ == "__main__":
    key = jax.random.PRNGKey(0)
    fwd = jax.jit(basic_block_forward, static_argnums=2)

    # bf16 MXU matmuls + bf16 HBM round-trips of y1/y2/sc vs. the f32-HIGHEST
    # reference: tolerance is loosened accordingly (deliberate precision trade).
    TOL = dict(rtol=5e-2, atol=8e-2)
    keys = jax.random.split(key, 10)

    def check(name, x, p, stride, want_shape):
        y = jax.block_until_ready(fwd(x, p, stride))
        r = basic_block_reference(x, p, stride)
        assert y.shape == want_shape, (name, y.shape, want_shape)
        err = float(jnp.max(jnp.abs(y - r)))
        assert jnp.allclose(y, r, **TOL), f"{name}: max err {err}"

    # 1: projection shortcut (stride=2, Cin != planes)
    x = jax.random.normal(keys[0], (2, 4, 16), jnp.float32)
    check("proj stride=2", x, init_params(keys[1], 4, 8, 2), 2, (2, 8, 8))

    # 2: identity shortcut (stride=1, Cin == planes)
    x = jax.random.normal(keys[2], (2, 8, 16), jnp.float32)
    check("identity", x, init_params(keys[3], 8, 8, 1), 1, (2, 8, 16))

    # 3: projection shortcut with stride=1 (Cin != planes)
    x = jax.random.normal(keys[4], (2, 4, 16), jnp.float32)
    check("proj stride=1", x, init_params(keys[5], 4, 8, 1), 1, (2, 8, 16))

    # 4: identity, Lout not a multiple of 8 (exercises row masking), B=3
    x = jax.random.normal(keys[6], (3, 8, 10), jnp.float32)
    check("identity L=10", x, init_params(keys[7], 8, 8, 1), 1, (3, 8, 10))

    # 5: projection, stride=2 with odd L (Lout=6 padded to 8)
    x = jax.random.normal(keys[8], (2, 4, 11), jnp.float32)
    check("proj stride=2 L=11", x, init_params(keys[9], 4, 8, 2), 2, (2, 8, 6))

    print("KERNEL_OK")
</pallas_src>

<mosaic_0001>
module attributes {stable_mosaic.version = 11 : i64} {
  func.func @_stage1_kernel(%arg0: i32, %arg1: memref<1x2x16x128xbf16, #tpu.memory_space<vmem>>, %arg2: memref<3x128x128xbf16, #tpu.memory_space<vmem>>, %arg3: memref<128x128xbf16, #tpu.memory_space<vmem>>, %arg4: memref<1x8x128xbf16, #tpu.memory_space<vmem>>, %arg5: memref<1x2x128xf32, #tpu.memory_space<vmem>>, %arg6: memref<1x8x128xbf16, #tpu.memory_space<vmem>>, %arg7: memref<1x2x128xf32, #tpu.memory_space<vmem>>) attributes {dimension_semantics = [#tpu.dimension_semantics<parallel>], iteration_bounds = array<i64: 2>, scalar_prefetch = 0 : i64, scratch_operands = 0 : i64, tpu.core_type = #tpu.core_type<tc>, window_params = [{transform_indices = @transform_0, window_bounds = array<i64: 1, 2, 16, 128>}, {pipeline_mode = #tpu.pipeline_mode<synchronous>, transform_indices = @transform_1, window_bounds = array<i64: 3, 128, 128>}, {pipeline_mode = #tpu.pipeline_mode<synchronous>, transform_indices = @transform_2, window_bounds = array<i64: 128, 128>}, {transform_indices = @transform_3, window_bounds = array<i64: 1, 8, 128>}, {transform_indices = @transform_4, window_bounds = array<i64: 1, 2, 128>}, {transform_indices = @transform_5, window_bounds = array<i64: 1, 8, 128>}, {transform_indices = @transform_6, window_bounds = array<i64: 1, 2, 128>}]} {
    %cst = arith.constant 0.000000e+00 : f32
    %0 = vector.broadcast %cst : f32 to vector<8x128xf32>
    %c0 = arith.constant 0 : index
    %c0_0 = arith.constant 0 : index
    %c0_1 = arith.constant 0 : index
    %c0_2 = arith.constant 0 : index
    %1 = vector.load %arg1[%c0, %c0_0, %c0_1, %c0_2] : memref<1x2x16x128xbf16, #tpu.memory_space<vmem>>, vector<1x1x8x128xbf16>
    %2 = vector.shape_cast %1 : vector<1x1x8x128xbf16> to vector<8x128xbf16>
    %c0_3 = arith.constant 0 : index
    %c0_4 = arith.constant 0 : index
    %c0_5 = arith.constant 0 : index
    %3 = vector.load %arg2[%c0_3, %c0_4, %c0_5] : memref<3x128x128xbf16, #tpu.memory_space<vmem>>, vector<1x128x128xbf16>
    %4 = vector.shape_cast %3 : vector<1x128x128xbf16> to vector<128x128xbf16>
    %cst_6 = arith.constant dense<0.000000e+00> : vector<8x128xf32>
    %5 = tpu.matmul %2, %4, %cst_6 {dimension_numbers = #tpu.dot_dimension_numbers<[1], [0], [0], [1], [0, 0, 1, 1], [], []>} : vector<8x128xbf16>, vector<128x128xbf16>, vector<8x128xf32> -> vector<8x128xf32>
    %6 = arith.addf %0, %5 : vector<8x128xf32>
    %c0_7 = arith.constant 0 : index
    %c1 = arith.constant 1 : index
    %c0_8 = arith.constant 0 : index
    %c0_9 = arith.constant 0 : index
    %7 = vector.load %arg1[%c0_7, %c1, %c0_8, %c0_9] : memref<1x2x16x128xbf16, #tpu.memory_space<vmem>>, vector<1x1x8x128xbf16>
    %8 = vector.shape_cast %7 : vector<1x1x8x128xbf16> to vector<8x128xbf16>
    %c1_10 = arith.constant 1 : index
    %c0_11 = arith.constant 0 : index
    %c0_12 = arith.constant 0 : index
    %9 = vector.load %arg2[%c1_10, %c0_11, %c0_12] : memref<3x128x128xbf16, #tpu.memory_space<vmem>>, vector<1x128x128xbf16>
    %10 = vector.shape_cast %9 : vector<1x128x128xbf16> to vector<128x128xbf16>
    %cst_13 = arith.constant dense<0.000000e+00> : vector<8x128xf32>
    %11 = tpu.matmul %8, %10, %cst_13 {dimension_numbers = #tpu.dot_dimension_numbers<[1], [0], [0], [1], [0, 0, 1, 1], [], []>} : vector<8x128xbf16>, vector<128x128xbf16>, vector<8x128xf32> -> vector<8x128xf32>
    %12 = arith.addf %6, %11 : vector<8x128xf32>
    %c0_14 = arith.constant 0 : index
    %c0_15 = arith.constant 0 : index
    %c1_16 = arith.constant 1 : index
    %c0_17 = arith.constant 0 : index
    %13 = vector.load %arg1[%c0_14, %c0_15, %c1_16, %c0_17] : memref<1x2x16x128xbf16, #tpu.memory_space<vmem>>, vector<1x1x8x128xbf16>
    %14 = vector.shape_cast %13 : vector<1x1x8x128xbf16> to vector<8x128xbf16>
    %c2 = arith.constant 2 : index
    %c0_18 = arith.constant 0 : index
    %c0_19 = arith.constant 0 : index
    %15 = vector.load %arg2[%c2, %c0_18, %c0_19] : memref<3x128x128xbf16, #tpu.memory_space<vmem>>, vector<1x128x128xbf16>
    %16 = vector.shape_cast %15 : vector<1x128x128xbf16> to vector<128x128xbf16>
    %cst_20 = arith.constant dense<0.000000e+00> : vector<8x128xf32>
    %17 = tpu.matmul %14, %16, %cst_20 {dimension_numbers = #tpu.dot_dimension_numbers<[1], [0], [0], [1], [0, 0, 1, 1], [], []>} : vector<8x128xbf16>, vector<128x128xbf16>, vector<8x128xf32> -> vector<8x128xf32>
    %18 = arith.addf %12, %17 : vector<8x128xf32>
    %19 = arith.truncf %18 : vector<8x128xf32> to vector<8x128xbf16>
    %c0_21 = arith.constant 0 : index
    %c0_22 = arith.constant 0 : index
    %c0_23 = arith.constant 0 : index
    %20 = vector.load %arg4[%c0_21, %c0_22, %c0_23] : memref<1x8x128xbf16, #tpu.memory_space<vmem>>, vector<1x8x128xbf16>
    %21 = vector.shape_cast %20 : vector<1x8x128xbf16> to vector<8x128xbf16>
    %22 = vector.shape_cast %19 : vector<8x128xbf16> to vector<1x8x128xbf16>
    tpu.vector_store %arg4[%c0_21, %c0_22, %c0_23], %22 {strides = array<i32>} : memref<1x8x128xbf16, #tpu.memory_space<vmem>>, vector<1x8x128xbf16>,
    %cst_24 = arith.constant dense<0.000000e+00> : vector<128xf32>
    %23 = vector.multi_reduction <add>, %18, %cst_24 [0] : vector<8x128xf32> to vector<128xf32>
    %24 = vector.shape_cast %23 : vector<128xf32> to vector<1x128xf32>
    %25 = arith.mulf %18, %18 : vector<8x128xf32>
    %cst_25 = arith.constant dense<0.000000e+00> : vector<128xf32>
    %26 = vector.multi_reduction <add>, %25, %cst_25 [0] : vector<8x128xf32> to vector<128xf32>
    %27 = vector.shape_cast %26 : vector<128xf32> to vector<1x128xf32>
    %28 = tpu.concatenate %24, %27 in 0 : vector<1x128xf32>, vector<1x128xf32> -> vector<2x128xf32>
    %c0_26 = arith.constant 0 : index
    %c0_27 = arith.constant 0 : index
    %c0_28 = arith.constant 0 : index
    %29 = vector.load %arg5[%c0_26, %c0_27, %c0_28] : memref<1x2x128xf32, #tpu.memory_space<vmem>>, vector<1x2x128xf32>
    %30 = vector.shape_cast %29 : vector<1x2x128xf32> to vector<2x128xf32>
    %31 = vector.shape_cast %28 : vector<2x128xf32> to vector<1x2x128xf32>
    tpu.vector_store %arg5[%c0_26, %c0_27, %c0_28], %31 {strides = array<i32>} : memref<1x2x128xf32, #tpu.memory_space<vmem>>, vector<1x2x128xf32>,
    %c0_29 = arith.constant 0 : index
    %c0_30 = arith.constant 0 : index
    %32 = vector.load %arg3[%c0_29, %c0_30] : memref<128x128xbf16, #tpu.memory_space<vmem>>, vector<128x128xbf16>
    %cst_31 = arith.constant dense<0.000000e+00> : vector<8x128xf32>
    %33 = tpu.matmul %8, %32, %cst_31 {dimension_numbers = #tpu.dot_dimension_numbers<[1], [0], [0], [1], [0, 0, 1, 1], [], []>} : vector<8x128xbf16>, vector<128x128xbf16>, vector<8x128xf32> -> vector<8x128xf32>
    %34 = arith.truncf %33 : vector<8x128xf32> to vector<8x128xbf16>
    %c0_32 = arith.constant 0 : index
    %c0_33 = arith.constant 0 : index
    %c0_34 = arith.constant 0 : index
    %35 = vector.load %arg6[%c0_32, %c0_33, %c0_34] : memref<1x8x128xbf16, #tpu.memory_space<vmem>>, vector<1x8x128xbf16>
    %36 = vector.shape_cast %35 : vector<1x8x128xbf16> to vector<8x128xbf16>
    %37 = vector.shape_cast %34 : vector<8x128xbf16> to vector<1x8x128xbf16>
    tpu.vector_store %arg6[%c0_32, %c0_33, %c0_34], %37 {strides = array<i32>} : memref<1x8x128xbf16, #tpu.memory_space<vmem>>, vector<1x8x128xbf16>,
    %cst_35 = arith.constant dense<0.000000e+00> : vector<128xf32>
    %38 = vector.multi_reduction <add>, %33, %cst_35 [0] : vector<8x128xf32> to vector<128xf32>
    %39 = vector.shape_cast %38 : vector<128xf32> to vector<1x128xf32>
    %40 = arith.mulf %33, %33 : vector<8x128xf32>
    %cst_36 = arith.constant dense<0.000000e+00> : vector<128xf32>
    %41 = vector.multi_reduction <add>, %40, %cst_36 [0] : vector<8x128xf32> to vector<128xf32>
    %42 = vector.shape_cast %41 : vector<128xf32> to vector<1x128xf32>
    %43 = tpu.concatenate %39, %42 in 0 : vector<1x128xf32>, vector<1x128xf32> -> vector<2x128xf32>
    %c0_37 = arith.constant 0 : index
    %c0_38 = arith.constant 0 : index
    %c0_39 = arith.constant 0 : index
    %44 = vector.load %arg7[%c0_37, %c0_38, %c0_39] : memref<1x2x128xf32, #tpu.memory_space<vmem>>, vector<1x2x128xf32>
    %45 = vector.shape_cast %44 : vector<1x2x128xf32> to vector<2x128xf32>
    %46 = vector.shape_cast %43 : vector<2x128xf32> to vector<1x2x128xf32>
    tpu.vector_store %arg7[%c0_37, %c0_38, %c0_39], %46 {strides = array<i32>} : memref<1x2x128xf32, #tpu.memory_space<vmem>>, vector<1x2x128xf32>,
    return
  }
  func.func @transform_0(%arg0: i32) -> (i32, i32, i32, i32) {
    %c0_i32 = arith.constant 0 : i32
    %c0_i32_0 = arith.constant 0 : i32
    %c0_i32_1 = arith.constant 0 : i32
    %c0_i32_2 = arith.constant 0 : i32
    return %arg0, %c0_i32, %c0_i32_0, %c0_i32_1 : i32, i32, i32, i32
  }
  func.func @transform_1(%arg0: i32) -> (i32, i32, i32) {
    %c0_i32 = arith.constant 0 : i32
    %c0_i32_0 = arith.constant 0 : i32
    %c0_i32_1 = arith.constant 0 : i32
    %c0_i32_2 = arith.constant 0 : i32
    return %c0_i32, %c0_i32_0, %c0_i32_1 : i32, i32, i32
  }
  func.func @transform_2(%arg0: i32) -> (i32, i32) {
    %c0_i32 = arith.constant 0 : i32
    %c0_i32_0 = arith.constant 0 : i32
    %c0_i32_1 = arith.constant 0 : i32
    return %c0_i32, %c0_i32_0 : i32, i32
  }
  func.func @transform_3(%arg0: i32) -> (i32, i32, i32) {
    %c0_i32 = arith.constant 0 : i32
    %c0_i32_0 = arith.constant 0 : i32
    %c0_i32_1 = arith.constant 0 : i32
    return %arg0, %c0_i32, %c0_i32_0 : i32, i32, i32
  }
  func.func @transform_4(%arg0: i32) -> (i32, i32, i32) {
    %c0_i32 = arith.constant 0 : i32
    %c0_i32_0 = arith.constant 0 : i32
    %c0_i32_1 = arith.constant 0 : i32
    return %arg0, %c0_i32, %c0_i32_0 : i32, i32, i32
  }
  func.func @transform_5(%arg0: i32) -> (i32, i32, i32) {
    %c0_i32 = arith.constant 0 : i32
    %c0_i32_0 = arith.constant 0 : i32
    %c0_i32_1 = arith.constant 0 : i32
    return %arg0, %c0_i32, %c0_i32_0 : i32, i32, i32
  }
  func.func @transform_6(%arg0: i32) -> (i32, i32, i32) {
    %c0_i32 = arith.constant 0 : i32
    %c0_i32_0 = arith.constant 0 : i32
    %c0_i32_1 = arith.constant 0 : i32
    return %arg0, %c0_i32, %c0_i32_0 : i32, i32, i32
  }
}

module attributes {stable_mosaic.version = 11 : i64} {
  func.func @_stage2_kernel(%arg0: i32, %arg1: memref<1x8x128xbf16, #tpu.memory_space<vmem>>, %arg2: memref<2x128xf32, #tpu.memory_space<vmem>>, %arg3: memref<3x128x128xbf16, #tpu.memory_space<vmem>>, %arg4: memref<1x8x128xbf16, #tpu.memory_space<vmem>>, %arg5: memref<1x2x128xf32, #tpu.memory_space<vmem>>, %arg6: memref<24x128xbf16, #tpu.memory_space<vmem>>) attributes {dimension_semantics = [#tpu.dimension_semantics<parallel>], iteration_bounds = array<i64: 2>, scalar_prefetch = 0 : i64, scratch_operands = 1 : i64, tpu.core_type = #tpu.core_type<tc>, window_params = [{transform_indices = @transform_0, window_bounds = array<i64: 1, 8, 128>}, {pipeline_mode = #tpu.pipeline_mode<synchronous>, transform_indices = @transform_1, window_bounds = array<i64: 2, 128>}, {pipeline_mode = #tpu.pipeline_mode<synchronous>, transform_indices = @transform_2, window_bounds = array<i64: 3, 128, 128>}, {transform_indices = @transform_3, window_bounds = array<i64: 1, 8, 128>}, {transform_indices = @transform_4, window_bounds = array<i64: 1, 2, 128>}]} {
    %c0 = arith.constant 0 : index
    %c0_0 = arith.constant 0 : index
    %c0_1 = arith.constant 0 : index
    %0 = vector.load %arg1[%c0, %c0_0, %c0_1] : memref<1x8x128xbf16, #tpu.memory_space<vmem>>, vector<1x8x128xbf16>
    %1 = vector.shape_cast %0 : vector<1x8x128xbf16> to vector<8x128xbf16>
    %2 = arith.extf %1 : vector<8x128xbf16> to vector<8x128xf32>
    %c0_2 = arith.constant 0 : index
    %c0_3 = arith.constant 0 : index
    %3 = vector.load %arg2[%c0_2, %c0_3] : memref<2x128xf32, #tpu.memory_space<vmem>>, vector<1x128xf32>
    %4 = vector.broadcast %3 : vector<1x128xf32> to vector<8x128xf32>
    %5 = arith.mulf %2, %4 : vector<8x128xf32>
    %c1 = arith.constant 1 : index
    %c0_4 = arith.constant 0 : index
    %6 = vector.load %arg2[%c1, %c0_4] : memref<2x128xf32, #tpu.memory_space<vmem>>, vector<1x128xf32>
    %7 = vector.broadcast %6 : vector<1x128xf32> to vector<8x128xf32>
    %8 = arith.addf %5, %7 : vector<8x128xf32>
    %cst = arith.constant 0.000000e+00 : f32
    %9 = vector.broadcast %cst : f32 to vector<8x128xf32>
    %10 = arith.maximumf %8, %9 : vector<8x128xf32>
    %cst_5 = arith.constant 0.000000e+00 : bf16
    %11 = vector.broadcast %cst_5 : bf16 to vector<8x128xbf16>
    %c0_6 = arith.constant 0 : index
    %c0_7 = arith.constant 0 : index
    %12 = vector.load %arg6[%c0_6, %c0_7] : memref<24x128xbf16, #tpu.memory_space<vmem>>, vector<8x128xbf16>
    tpu.vector_store %arg6[%c0_6, %c0_7], %11 {strides = array<i32>} : memref<24x128xbf16, #tpu.memory_space<vmem>>, vector<8x128xbf16>,
    %cst_8 = arith.constant 0.000000e+00 : bf16
    %13 = vector.broadcast %cst_8 : bf16 to vector<8x128xbf16>
    %c16 = arith.constant 16 : index
    %c0_9 = arith.constant 0 : index
    %14 = vector.load %arg6[%c16, %c0_9] : memref<24x128xbf16, #tpu.memory_space<vmem>>, vector<8x128xbf16>
    tpu.vector_store %arg6[%c16, %c0_9], %13 {strides = array<i32>} : memref<24x128xbf16, #tpu.memory_space<vmem>>, vector<8x128xbf16>,
    %15 = arith.truncf %10 : vector<8x128xf32> to vector<8x128xbf16>
    %c8 = arith.constant 8 : index
    %c0_10 = arith.constant 0 : index
    %16 = vector.load %arg6[%c8, %c0_10] : memref<24x128xbf16, #tpu.memory_space<vmem>>, vector<8x128xbf16>
    tpu.vector_store %arg6[%c8, %c0_10], %15 {strides = array<i32>} : memref<24x128xbf16, #tpu.memory_space<vmem>>, vector<8x128xbf16>,
    %cst_11 = arith.constant 0.000000e+00 : f32
    %17 = vector.broadcast %cst_11 : f32 to vector<8x128xf32>
    %c7 = arith.constant 7 : index
    %c0_12 = arith.constant 0 : index
    %18 = vector.load %arg6[%c7, %c0_12] : memref<24x128xbf16, #tpu.memory_space<vmem>>, vector<8x128xbf16>
    %c0_13 = arith.constant 0 : index
    %c0_14 = arith.constant 0 : index
    %c0_15 = arith.constant 0 : index
    %19 = vector.load %arg3[%c0_13, %c0_14, %c0_15] : memref<3x128x128xbf16, #tpu.memory_space<vmem>>, vector<1x128x128xbf16>
    %20 = vector.shape_cast %19 : vector<1x128x128xbf16> to vector<128x128xbf16>
    %cst_16 = arith.constant dense<0.000000e+00> : vector<8x128xf32>
    %21 = tpu.matmul %18, %20, %cst_16 {dimension_numbers = #tpu.dot_dimension_numbers<[1], [0], [0], [1], [0, 0, 1, 1], [], []>} : vector<8x128xbf16>, vector<128x128xbf16>, vector<8x128xf32> -> vector<8x128xf32>
    %22 = arith.addf %17, %21 : vector<8x128xf32>
    %c8_17 = arith.constant 8 : index
    %c0_18 = arith.constant 0 : index
    %23 = vector.load %arg6[%c8_17, %c0_18] : memref<24x128xbf16, #tpu.memory_space<vmem>>, vector<8x128xbf16>
    %c1_19 = arith.constant 1 : index
    %c0_20 = arith.constant 0 : index
    %c0_21 = arith.constant 0 : index
    %24 = vector.load %arg3[%c1_19, %c0_20, %c0_21] : memref<3x128x128xbf16, #tpu.memory_space<vmem>>, vector<1x128x128xbf16>
    %25 = vector.shape_cast %24 : vector<1x128x128xbf16> to vector<128x128xbf16>
    %cst_22 = arith.constant dense<0.000000e+00> : vector<8x128xf32>
    %26 = tpu.matmul %23, %25, %cst_22 {dimension_numbers = #tpu.dot_dimension_numbers<[1], [0], [0], [1], [0, 0, 1, 1], [], []>} : vector<8x128xbf16>, vector<128x128xbf16>, vector<8x128xf32> -> vector<8x128xf32>
    %27 = arith.addf %22, %26 : vector<8x128xf32>
    %c9 = arith.constant 9 : index
    %c0_23 = arith.constant 0 : index
    %28 = vector.load %arg6[%c9, %c0_23] : memref<24x128xbf16, #tpu.memory_space<vmem>>, vector<8x128xbf16>
    %c2 = arith.constant 2 : index
    %c0_24 = arith.constant 0 : index
    %c0_25 = arith.constant 0 : index
    %29 = vector.load %arg3[%c2, %c0_24, %c0_25] : memref<3x128x128xbf16, #tpu.memory_space<vmem>>, vector<1x128x128xbf16>
    %30 = vector.shape_cast %29 : vector<1x128x128xbf16> to vector<128x128xbf16>
    %cst_26 = arith.constant dense<0.000000e+00> : vector<8x128xf32>
    %31 = tpu.matmul %28, %30, %cst_26 {dimension_numbers = #tpu.dot_dimension_numbers<[1], [0], [0], [1], [0, 0, 1, 1], [], []>} : vector<8x128xbf16>, vector<128x128xbf16>, vector<8x128xf32> -> vector<8x128xf32>
    %32 = arith.addf %27, %31 : vector<8x128xf32>
    %33 = arith.truncf %32 : vector<8x128xf32> to vector<8x128xbf16>
    %c0_27 = arith.constant 0 : index
    %c0_28 = arith.constant 0 : index
    %c0_29 = arith.constant 0 : index
    %34 = vector.load %arg4[%c0_27, %c0_28, %c0_29] : memref<1x8x128xbf16, #tpu.memory_space<vmem>>, vector<1x8x128xbf16>
    %35 = vector.shape_cast %34 : vector<1x8x128xbf16> to vector<8x128xbf16>
    %36 = vector.shape_cast %33 : vector<8x128xbf16> to vector<1x8x128xbf16>
    tpu.vector_store %arg4[%c0_27, %c0_28, %c0_29], %36 {strides = array<i32>} : memref<1x8x128xbf16, #tpu.memory_space<vmem>>, vector<1x8x128xbf16>,
    %cst_30 = arith.constant dense<0.000000e+00> : vector<128xf32>
    %37 = vector.multi_reduction <add>, %32, %cst_30 [0] : vector<8x128xf32> to vector<128xf32>
    %38 = vector.shape_cast %37 : vector<128xf32> to vector<1x128xf32>
    %39 = arith.mulf %32, %32 : vector<8x128xf32>
    %cst_31 = arith.constant dense<0.000000e+00> : vector<128xf32>
    %40 = vector.multi_reduction <add>, %39, %cst_31 [0] : vector<8x128xf32> to vector<128xf32>
    %41 = vector.shape_cast %40 : vector<128xf32> to vector<1x128xf32>
    %42 = tpu.concatenate %38, %41 in 0 : vector<1x128xf32>, vector<1x128xf32> -> vector<2x128xf32>
    %c0_32 = arith.constant 0 : index
    %c0_33 = arith.constant 0 : index
    %c0_34 = arith.constant 0 : index
    %43 = vector.load %arg5[%c0_32, %c0_33, %c0_34] : memref<1x2x128xf32, #tpu.memory_space<vmem>>, vector<1x2x128xf32>
    %44 = vector.shape_cast %43 : vector<1x2x128xf32> to vector<2x128xf32>
    %45 = vector.shape_cast %42 : vector<2x128xf32> to vector<1x2x128xf32>
    tpu.vector_store %arg5[%c0_32, %c0_33, %c0_34], %45 {strides = array<i32>} : memref<1x2x128xf32, #tpu.memory_space<vmem>>, vector<1x2x128xf32>,
    return
  }
  func.func @transform_0(%arg0: i32) -> (i32, i32, i32) {
    %c0_i32 = arith.constant 0 : i32
    %c0_i32_0 = arith.constant 0 : i32
    %c0_i32_1 = arith.constant 0 : i32
    return %arg0, %c0_i32, %c0_i32_0 : i32, i32, i32
  }
  func.func @transform_1(%arg0: i32) -> (i32, i32) {
    %c0_i32 = arith.constant 0 : i32
    %c0_i32_0 = arith.constant 0 : i32
    %c0_i32_1 = arith.constant 0 : i32
    return %c0_i32, %c0_i32_0 : i32, i32
  }
  func.func @transform_2(%arg0: i32) -> (i32, i32, i32) {
    %c0_i32 = arith.constant 0 : i32
    %c0_i32_0 = arith.constant 0 : i32
    %c0_i32_1 = arith.constant 0 : i32
    %c0_i32_2 = arith.constant 0 : i32
    return %c0_i32, %c0_i32_0, %c0_i32_1 : i32, i32, i32
  }
  func.func @transform_3(%arg0: i32) -> (i32, i32, i32) {
    %c0_i32 = arith.constant 0 : i32
    %c0_i32_0 = arith.constant 0 : i32
    %c0_i32_1 = arith.constant 0 : i32
    return %arg0, %c0_i32, %c0_i32_0 : i32, i32, i32
  }
  func.func @transform_4(%arg0: i32) -> (i32, i32, i32) {
    %c0_i32 = arith.constant 0 : i32
    %c0_i32_0 = arith.constant 0 : i32
    %c0_i32_1 = arith.constant 0 : i32
    return %arg0, %c0_i32, %c0_i32_0 : i32, i32, i32
  }
}

module attributes {stable_mosaic.version = 11 : i64} {
  func.func @_stage3_kernel(%arg0: i32, %arg1: memref<1x8x128xbf16, #tpu.memory_space<vmem>>, %arg2: memref<1x8x128xbf16, #tpu.memory_space<vmem>>, %arg3: memref<2x128xf32, #tpu.memory_space<vmem>>, %arg4: memref<2x128xf32, #tpu.memory_space<vmem>>, %arg5: memref<1x8x128xbf16, #tpu.memory_space<vmem>>) attributes {dimension_semantics = [#tpu.dimension_semantics<parallel>], iteration_bounds = array<i64: 2>, scalar_prefetch = 0 : i64, scratch_operands = 0 : i64, tpu.core_type = #tpu.core_type<tc>, window_params = [{transform_indices = @transform_0, window_bounds = array<i64: 1, 8, 128>}, {transform_indices = @transform_1, window_bounds = array<i64: 1, 8, 128>}, {pipeline_mode = #tpu.pipeline_mode<synchronous>, transform_indices = @transform_2, window_bounds = array<i64: 2, 128>}, {pipeline_mode = #tpu.pipeline_mode<synchronous>, transform_indices = @transform_3, window_bounds = array<i64: 2, 128>}, {transform_indices = @transform_4, window_bounds = array<i64: 1, 8, 128>}]} {
    %c0 = arith.constant 0 : index
    %c0_0 = arith.constant 0 : index
    %c0_1 = arith.constant 0 : index
    %0 = vector.load %arg1[%c0, %c0_0, %c0_1] : memref<1x8x128xbf16, #tpu.memory_space<vmem>>, vector<1x8x128xbf16>
    %1 = vector.shape_cast %0 : vector<1x8x128xbf16> to vector<8x128xbf16>
    %2 = arith.extf %1 : vector<8x128xbf16> to vector<8x128xf32>
    %c0_2 = arith.constant 0 : index
    %c0_3 = arith.constant 0 : index
    %3 = vector.load %arg3[%c0_2, %c0_3] : memref<2x128xf32, #tpu.memory_space<vmem>>, vector<1x128xf32>
    %4 = vector.broadcast %3 : vector<1x128xf32> to vector<8x128xf32>
    %5 = arith.mulf %2, %4 : vector<8x128xf32>
    %c1 = arith.constant 1 : index
    %c0_4 = arith.constant 0 : index
    %6 = vector.load %arg3[%c1, %c0_4] : memref<2x128xf32, #tpu.memory_space<vmem>>, vector<1x128xf32>
    %7 = vector.broadcast %6 : vector<1x128xf32> to vector<8x128xf32>
    %8 = arith.addf %5, %7 : vector<8x128xf32>
    %c0_5 = arith.constant 0 : index
    %c0_6 = arith.constant 0 : index
    %c0_7 = arith.constant 0 : index
    %9 = vector.load %arg2[%c0_5, %c0_6, %c0_7] : memref<1x8x128xbf16, #tpu.memory_space<vmem>>, vector<1x8x128xbf16>
    %10 = vector.shape_cast %9 : vector<1x8x128xbf16> to vector<8x128xbf16>
    %11 = arith.extf %10 : vector<8x128xbf16> to vector<8x128xf32>
    %c0_8 = arith.constant 0 : index
    %c0_9 = arith.constant 0 : index
    %12 = vector.load %arg4[%c0_8, %c0_9] : memref<2x128xf32, #tpu.memory_space<vmem>>, vector<1x128xf32>
    %13 = vector.broadcast %12 : vector<1x128xf32> to vector<8x128xf32>
    %14 = arith.mulf %11, %13 : vector<8x128xf32>
    %c1_10 = arith.constant 1 : index
    %c0_11 = arith.constant 0 : index
    %15 = vector.load %arg4[%c1_10, %c0_11] : memref<2x128xf32, #tpu.memory_space<vmem>>, vector<1x128xf32>
    %16 = vector.broadcast %15 : vector<1x128xf32> to vector<8x128xf32>
    %17 = arith.addf %14, %16 : vector<8x128xf32>
    %18 = arith.addf %8, %17 : vector<8x128xf32>
    %cst = arith.constant 0.000000e+00 : f32
    %19 = vector.broadcast %cst : f32 to vector<8x128xf32>
    %20 = arith.maximumf %18, %19 : vector<8x128xf32>
    %21 = arith.truncf %20 : vector<8x128xf32> to vector<8x128xbf16>
    %c0_12 = arith.constant 0 : index
    %c0_13 = arith.constant 0 : index
    %c0_14 = arith.constant 0 : index
    %22 = vector.load %arg5[%c0_12, %c0_13, %c0_14] : memref<1x8x128xbf16, #tpu.memory_space<vmem>>, vector<1x8x128xbf16>
    %23 = vector.shape_cast %22 : vector<1x8x128xbf16> to vector<8x128xbf16>
    %24 = vector.shape_cast %21 : vector<8x128xbf16> to vector<1x8x128xbf16>
    tpu.vector_store %arg5[%c0_12, %c0_13, %c0_14], %24 {strides = array<i32>} : memref<1x8x128xbf16, #tpu.memory_space<vmem>>, vector<1x8x128xbf16>,
    return
  }
  func.func @transform_0(%arg0: i32) -> (i32, i32, i32) {
    %c0_i32 = arith.constant 0 : i32
    %c0_i32_0 = arith.constant 0 : i32
    %c0_i32_1 = arith.constant 0 : i32
    return %arg0, %c0_i32, %c0_i32_0 : i32, i32, i32
  }
  func.func @transform_1(%arg0: i32) -> (i32, i32, i32) {
    %c0_i32 = arith.constant 0 : i32
    %c0_i32_0 = arith.constant 0 : i32
    %c0_i32_1 = arith.constant 0 : i32
    return %arg0, %c0_i32, %c0_i32_0 : i32, i32, i32
  }
  func.func @transform_2(%arg0: i32) -> (i32, i32) {
    %c0_i32 = arith.constant 0 : i32
    %c0_i32_0 = arith.constant 0 : i32
    %c0_i32_1 = arith.constant 0 : i32
    return %c0_i32, %c0_i32_0 : i32, i32
  }
  func.func @transform_3(%arg0: i32) -> (i32, i32) {
    %c0_i32 = arith.constant 0 : i32
    %c0_i32_0 = arith.constant 0 : i32
    %c0_i32_1 = arith.constant 0 : i32
    return %c0_i32, %c0_i32_0 : i32, i32
  }
  func.func @transform_4(%arg0: i32) -> (i32, i32, i32) {
    %c0_i32 = arith.constant 0 : i32
    %c0_i32_0 = arith.constant 0 : i32
    %c0_i32_1 = arith.constant 0 : i32
    return %arg0, %c0_i32, %c0_i32_0 : i32, i32, i32
  }
}

</mosaic_0001>

<llo_original>
// kernel: basic_block_forward.5
$region0: #{basic_block_forward.5}
  #allocation0 [shape = 'u32[]', space=smem, size = 0x4, offset = 0x4, fixed_abs, tag = 'smem constant byte address 0x4 - core index']
  #allocation1 [shape = 'u32[144,128]{1,0:T(1,128)}', space=vmem, size = 0x12000, scoped, tag = 'internal scratch']
  %s0 = inlined_call_operand.vmem [shape: bf16[2,8,128], index: 0, kind: input, shape index: {}]
  %s1 = inlined_call_operand.vmem [shape: bf16[2,8,128], index: 1, kind: input, shape index: {}]
  %s2 = inlined_call_operand.vmem [shape: f32[2,128], index: 2, kind: input, shape index: {}]
  %s3 = inlined_call_operand.vmem [shape: f32[2,128], index: 3, kind: input, shape index: {}]
  %s4 = inlined_call_operand.vmem [shape: bf16[2,8,128], index: 4, kind: output, shape index: {}]
  %s5 = sld [smem:[#allocation0]]
  $region49: #{basic_block_forward.5} parent=0
    _
  %s7 = ssub.s32 1, %s5
  %s8 = scalar_select 0, %s7, %s5
  loop: start=0, step=1, limit=4
  $region2: #{basic_block_forward.5} parent=0 // loop_pre_header
    _
  $region3: #{basic_block_forward.5} parent=0 // loop_header
    %s10 = sphi 0, %s14
    %p11 = scmp.ge.s32.totalorder %s10, 4
    %s20 = sphi 0, %s22
    %s23 = sphi 0, %s20
    %s24 = sphi 0, %s23
    %s40 = sphi 0, %s24
    %s46 = sphi 0, %s48
    %s49 = sphi 0, %s46
    %s50 = sphi 0, %s49
    %s66 = sphi 0, %s50
    %s70 = sphi 0, %s70
    %s72 = sphi 0, %s70
    %s73 = sphi 0, %s72
    %s87 = sphi 0, %s73
    %s91 = sphi 0, %s91
    %s93 = sphi 0, %s91
    %s94 = sphi 0, %s93
    %s108 = sphi 0, %s94
    %s114 = sphi 0, %s116
    %s117 = sphi 0, %s114
    %s118 = sphi 0, %s117
    %s134 = sphi 0, %s118
  $region4: #{basic_block_forward.5} parent=0 // loop_header_branch
    %13 = sbr.rel (%p11) target = $region8
  $region5: #{basic_block_forward.5} parent=0 // loop_body
    %s15 = ssub.s32 %s10, 1
    %s16 = ssub.s32 %s10, 2
    %s17 = sadd.s32 %s10, 1
    %s18 = ssub.s32 %s10, %s17
    %p19 = scmp.eq.s32.totalorder %s18, 0
    %s21 = sadd.s32 %s20, 1
    %s22 = scalar_select %p19, %s20, %s21
    %p25 = pneg %p19
    %p26 = scmp.eq.s32.totalorder %s10, 1
    %p27 = por %p25, %p26
    %p28 = scmp.ne.s32.totalorder %s20, %s23
    %p29 = scmp.eq.s32.totalorder %s10, 0
    %p30 = por %p28, %p29
    %p31 = scmp.ne.s32.totalorder %s20, %s23
    %p32 = scmp.eq.s32.totalorder %s15, 1
    %p33 = por %p31, %p32
    %p34 = scmp.ne.s32.totalorder %s23, %s24
    %p35 = scmp.eq.s32.totalorder %s15, 0
    %p36 = por %p34, %p35
    %p37 = scmp.ne.s32.totalorder %s23, %s24
    %p38 = scmp.eq.s32.totalorder %s16, 1
    %p39 = por %p37, %p38
    %p41 = scmp.ne.s32.totalorder %s24, %s40
    %p42 = scmp.eq.s32.totalorder %s16, 0
    %p43 = por %p41, %p42
    %s44 = ssub.s32 %s10, %s17
    %p45 = scmp.eq.s32.totalorder %s44, 0
    %s47 = sadd.s32 %s46, 1
    %s48 = scalar_select %p45, %s46, %s47
    %p51 = pneg %p45
    %p52 = scmp.eq.s32.totalorder %s10, 1
    %p53 = por %p51, %p52
    %p54 = scmp.ne.s32.totalorder %s46, %s49
    %p55 = scmp.eq.s32.totalorder %s10, 0
    %p56 = por %p54, %p55
    %p57 = scmp.ne.s32.totalorder %s46, %s49
    %p58 = scmp.eq.s32.totalorder %s15, 1
    %p59 = por %p57, %p58
    %p60 = scmp.ne.s32.totalorder %s49, %s50
    %p61 = scmp.eq.s32.totalorder %s15, 0
    %p62 = por %p60, %p61
    %p63 = scmp.ne.s32.totalorder %s49, %s50
    %p64 = scmp.eq.s32.totalorder %s16, 1
    %p65 = por %p63, %p64
    %p67 = scmp.ne.s32.totalorder %s50, %s66
    %p68 = scmp.eq.s32.totalorder %s16, 0
    %p69 = por %p67, %p68
    %s71 = sadd.s32 %s70, 1
    %p74 = scmp.eq.s32.totalorder %s10, 1
    %p75 = scmp.ne.s32.totalorder %s70, %s72
    %p76 = scmp.eq.s32.totalorder %s10, 0
    %p77 = por %p75, %p76
    %p78 = scmp.ne.s32.totalorder %s70, %s72
    %p79 = scmp.eq.s32.totalorder %s15, 1
    %p80 = por %p78, %p79
    %p81 = scmp.ne.s32.totalorder %s72, %s73
    %p82 = scmp.eq.s32.totalorder %s15, 0
    %p83 = por %p81, %p82
    %p84 = scmp.ne.s32.totalorder %s72, %s73
    %p85 = scmp.eq.s32.totalorder %s16, 1
    %p86 = por %p84, %p85
    %p88 = scmp.ne.s32.totalorder %s73, %s87
    %p89 = scmp.eq.s32.totalorder %s16, 0
    %p90 = por %p88, %p89
    %s92 = sadd.s32 %s91, 1
    %p95 = scmp.eq.s32.totalorder %s10, 1
    %p96 = scmp.ne.s32.totalorder %s91, %s93
    %p97 = scmp.eq.s32.totalorder %s10, 0
    %p98 = por %p96, %p97
    %p99 = scmp.ne.s32.totalorder %s91, %s93
    %p100 = scmp.eq.s32.totalorder %s15, 1
    %p101 = por %p99, %p100
    %p102 = scmp.ne.s32.totalorder %s93, %s94
    %p103 = scmp.eq.s32.totalorder %s15, 0
    %p104 = por %p102, %p103
    %p105 = scmp.ne.s32.totalorder %s93, %s94
    %p106 = scmp.eq.s32.totalorder %s16, 1
    %p107 = por %p105, %p106
    %p109 = scmp.ne.s32.totalorder %s94, %s108
    %p110 = scmp.eq.s32.totalorder %s16, 0
    %p111 = por %p109, %p110
    %s112 = ssub.s32 %s10, %s17
    %p113 = scmp.eq.s32.totalorder %s112, 0
    %s115 = sadd.s32 %s114, 1
    %s116 = scalar_select %p113, %s114, %s115
    %p119 = pneg %p113
    %p120 = scmp.eq.s32.totalorder %s10, 1
    %p121 = por %p119, %p120
    %p122 = scmp.ne.s32.totalorder %s114, %s117
    %p123 = scmp.eq.s32.totalorder %s10, 0
    %p124 = por %p122, %p123
    %p125 = scmp.ne.s32.totalorder %s114, %s117
    %p126 = scmp.eq.s32.totalorder %s15, 1
    %p127 = por %p125, %p126
    %p128 = scmp.ne.s32.totalorder %s117, %s118
    %p129 = scmp.eq.s32.totalorder %s15, 0
    %p130 = por %p128, %p129
    %p131 = scmp.ne.s32.totalorder %s117, %s118
    %p132 = scmp.eq.s32.totalorder %s16, 1
    %p133 = por %p131, %p132
    %p135 = scmp.ne.s32.totalorder %s118, %s134
    %p136 = scmp.eq.s32.totalorder %s16, 0
    %p137 = por %p135, %p136
    %p138 = scmp.le.s32.totalorder 1, %s10
    %p139 = scmp.lt.s32.totalorder %s10, 3
    %p140 = pnand %p138, %p139
    %p141 = pneg %p140
    // Predicated region
    $region9: #{basic_block_forward.5} parent=5 // pred_check
      _
    $region10: #{basic_block_forward.5} parent=5 // pred_check_branch
      %143 = sbr.rel (%p140) target = $region12
    $region11: #{basic_block_forward.5} parent=5 // pred_region
      %s144 = ssub.s32 %s10, 1
      // Predicated region
      $region13: #{basic_block_forward.5} parent=11 // pred_check
        %p145 = pneg %p83
      $region14: #{basic_block_forward.5} parent=11 // pred_check_branch
        %147 = sbr.rel (%p145) target = $region16
      $region15: #{basic_block_forward.5} parent=11 // pred_region
        _
      $region16: #{basic_block_forward.5} parent=11 // pred_fallthru
        _
      // Predicated region
      $region17: #{basic_block_forward.5} parent=11 // pred_check
        %p148 = pneg %p104
      $region18: #{basic_block_forward.5} parent=11 // pred_check_branch
        %150 = sbr.rel (%p148) target = $region20
      $region19: #{basic_block_forward.5} parent=11 // pred_region
        _
      $region20: #{basic_block_forward.5} parent=11 // pred_fallthru
        _
    $region12: #{basic_block_forward.5} parent=5 // pred_fallthru
      _
    %p151 = scmp.lt.s32.totalorder %s10, 2
    // Predicated region
    $region21: #{basic_block_forward.5} parent=5 // pred_check
      %p152 = pneg %p151
    $region22: #{basic_block_forward.5} parent=5 // pred_check_branch
      %154 = sbr.rel (%p152) target = $region24
    $region23: #{basic_block_forward.5} parent=5 // pred_region
      // Predicated region
      $region25: #{basic_block_forward.5} parent=23 // pred_check
        %p155 = pneg %p30
      $region26: #{basic_block_forward.5} parent=23 // pred_check_branch
        %157 = sbr.rel (%p155) target = $region28
      $region27: #{basic_block_forward.5} parent=23 // pred_region
        %p158 = scmp.lt.s32.totalorder %s10, 1
        %s159 = scalar_select %p158, %s10, 1
        %s160 = smul.addr %s159, 4
        %s161 = scalar_lea.vmem %s0, %s160
      $region28: #{basic_block_forward.5} parent=23 // pred_fallthru
        _
      // Predicated region
      $region29: #{basic_block_forward.5} parent=23 // pred_check
        %p162 = pneg %p56
      $region30: #{basic_block_forward.5} parent=23 // pred_check_branch
        %164 = sbr.rel (%p162) target = $region32
      $region31: #{basic_block_forward.5} parent=23 // pred_region
        %p165 = scmp.lt.s32.totalorder %s10, 1
        %s166 = scalar_select %p165, %s10, 1
        %s167 = smul.addr %s166, 4
        %s168 = scalar_lea.vmem %s1, %s167
      $region32: #{basic_block_forward.5} parent=23 // pred_fallthru
        _
    $region24: #{basic_block_forward.5} parent=5 // pred_fallthru
      _
    %p169 = scmp.le.s32.totalorder 1, %s10
    %p170 = scmp.lt.s32.totalorder %s10, 3
    %p171 = pnand %p169, %p170
    %p172 = pneg %p171
    // Predicated region
    $region33: #{basic_block_forward.5} parent=5 // pred_check
      _
    $region34: #{basic_block_forward.5} parent=5 // pred_check_branch
      %174 = sbr.rel (%p171) target = $region36
    $region35: #{basic_block_forward.5} parent=5 // pred_region
      %s175 = ssub.s32 %s10, 1
      %p176 = scmp.lt.s32.totalorder %s15, 1
      %s177 = scalar_select %p176, %s15, 1
      %s178 = smul.addr %s177, 4
      %s179 = scalar_lea.vmem %s0, %s178
      %p180 = pneg %p36
      %p181 = pneg %p33
      %p182 = scmp.lt.s32.totalorder %s15, 1
      %s183 = scalar_select %p182, %s15, 1
      %s184 = smul.addr %s183, 4
      %s185 = scalar_lea.vmem %s1, %s184
      %p186 = pneg %p62
      %p187 = pneg %p59
      %p188 = pneg %p83
      %p189 = pneg %p80
      %p190 = pneg %p104
      %p191 = pneg %p101
      %p192 = pneg %p130
      %p193 = pneg %p127
      %p194 = scmp.lt.s32.totalorder %s15, 1
      %s195 = scalar_select %p194, %s15, 1
      %s196 = smul.addr %s195, 4
      %s197 = scalar_lea.vmem %s4, %s196
      %p198 = scmp.lt.s32.totalorder %s15, 1
      %s199 = scalar_select %p198, %s15, 1
      %s200 = smul.addr %s199, 4
      %s201 = scalar_lea.vmem %s0, %s200
      %p202 = scmp.lt.s32.totalorder %s15, 1
      %s203 = scalar_select %p202, %s15, 1
      %s204 = smul.addr %s203, 4
      %s205 = scalar_lea.vmem %s1, %s204
      %p206 = scmp.lt.s32.totalorder %s15, 1
      %s207 = scalar_select %p206, %s15, 1
      %s208 = smul.addr %s207, 4
      %s209 = scalar_lea.vmem %s4, %s208
      %v210 = vld [vmem:[%s201] sm:$0xf]
      %v211 = vunpack.c.l.bf16 %v210
      %v212 = vld [vmem:[%s2] sm:$0x1]
      %v213 = vlaneseq
      %v214 = vshrl.u32 %v213, 7
      %v215 = vsub.s32 0, %v214
      %v216 = vrot.slane %v212, %v215
      %v217 = vmul.f32 %v211, %v216
      %v218 = vld [vmem:[%s2 + $0x1] sm:$0x1]
      %v219 = vlaneseq
      %v220 = vshrl.u32 %v219, 7
      %v221 = vsub.s32 0, %v220
      %v222 = vrot.slane %v218, %v221
      %v223 = vadd.f32 %v217, %v222
      %v224 = vld [vmem:[%s205] sm:$0xf]
      %v225 = vunpack.c.l.bf16 %v224
      %v226 = vld [vmem:[%s3] sm:$0x1]
      %v227 = vlaneseq
      %v228 = vshrl.u32 %v227, 7
      %v229 = vsub.s32 0, %v228
      %v230 = vrot.slane %v226, %v229
      %v231 = vmul.f32 %v225, %v230
      %v232 = vld [vmem:[%s3 + $0x1] sm:$0x1]
      %v233 = vlaneseq
      %v234 = vshrl.u32 %v233, 7
      %v235 = vsub.s32 0, %v234
      %v236 = vrot.slane %v232, %v235
      %v237 = vadd.f32 %v231, %v236
      %v238 = vadd.f32 %v223, %v237
      %v239 = vmax.f32 %v238, 0.0
      %v240 = vpack.c.bf16 %v239, %v239
      %241 = vst [vmem:[%s209] sm:$0xf] %v240
      %p242 = scmp.lt.s32.totalorder %s15, 1
      %s243 = scalar_select %p242, %s15, 1
      %s244 = smul.addr %s243, 4
      %s245 = scalar_lea.vmem %s4, %s244
      // Predicated region
      $region37: #{basic_block_forward.5} parent=35 // pred_check
        %p246 = pneg %p127
      $region38: #{basic_block_forward.5} parent=35 // pred_check_branch
        %248 = sbr.rel (%p246) target = $region40
      $region39: #{basic_block_forward.5} parent=35 // pred_region
        _
      $region40: #{basic_block_forward.5} parent=35 // pred_fallthru
        _
    $region36: #{basic_block_forward.5} parent=5 // pred_fallthru
      _
    %p249 = scmp.le.s32.totalorder 2, %s10
    // Predicated region
    $region41: #{basic_block_forward.5} parent=5 // pred_check
      %p250 = pneg %p249
    $region42: #{basic_block_forward.5} parent=5 // pred_check_branch
      %252 = sbr.rel (%p250) target = $region44
    $region43: #{basic_block_forward.5} parent=5 // pred_region
      %s253 = ssub.s32 %s10, 2
      // Predicated region
      $region45: #{basic_block_forward.5} parent=43 // pred_check
        %p254 = pneg %p133
      $region46: #{basic_block_forward.5} parent=43 // pred_check_branch
        %256 = sbr.rel (%p254) target = $region48
      $region47: #{basic_block_forward.5} parent=43 // pred_region
        %p257 = scmp.lt.s32.totalorder %s16, 1
        %s258 = scalar_select %p257, %s16, 1
        %s259 = smul.addr %s258, 4
        %s260 = scalar_lea.vmem %s4, %s259
      $region48: #{basic_block_forward.5} parent=43 // pred_fallthru
        _
    $region44: #{basic_block_forward.5} parent=5 // pred_fallthru
      _
  $region6: #{basic_block_forward.5} parent=0 // loop_footer
    %s14 = sadd.s32 1, %s10
  $region7: #{basic_block_forward.5} parent=0 // loop_footer_branch
    %9 = sbr.rel target = $region3
  $region8: #{basic_block_forward.5} parent=0 // loop_exit
    _

// kernel: basic_block_forward.4
$region0: #{basic_block_forward.4}
  #allocation0 [shape = 'u32[]', space=smem, size = 0x4, offset = 0x4, fixed_abs, tag = 'smem constant byte address 0x4 - core index']
  #allocation1 [shape = 'u32[144,128]{1,0:T(1,128)}', space=vmem, size = 0x12000, scoped, tag = 'internal scratch']
  #allocation2 [shape = 'bf16[24,128]{1,0:T(8,128)(2,1)}', space=vmem, size = 0x1800, scoped, tag = 'scratch operand']
  %s0 = inlined_call_operand.vmem [shape: bf16[2,8,128], index: 0, kind: input, shape index: {}]
  %s1 = inlined_call_operand.vmem [shape: f32[2,128], index: 1, kind: input, shape index: {}]
  %s2 = inlined_call_operand.vmem [shape: bf16[3,128,128], index: 2, kind: input, shape index: {}]
  %s3 = inlined_call_operand.vmem [shape: bf16[2,8,128], index: 3, kind: output, shape index: {0}]
  %s4 = inlined_call_operand.vmem [shape: f32[2,2,128], index: 4, kind: output, shape index: {1}]
  %5 = xla_tuple %s3, %s4
  %s6 = sld [smem:[#allocation0]]
  $region53: #{basic_block_forward.4} parent=0
    _
  %s8 = ssub.s32 1, %s6
  %s9 = scalar_select 0, %s8, %s6
  loop: start=0, step=1, limit=4
  $region2: #{basic_block_forward.4} parent=0 // loop_pre_header
    _
  $region3: #{basic_block_forward.4} parent=0 // loop_header
    %s11 = sphi 0, %s15
    %p12 = scmp.ge.s32.totalorder %s11, 4
    %s21 = sphi 0, %s23
    %s24 = sphi 0, %s21
    %s25 = sphi 0, %s24
    %s41 = sphi 0, %s25
    %s45 = sphi 0, %s45
    %s47 = sphi 0, %s45
    %s48 = sphi 0, %s47
    %s62 = sphi 0, %s48
    %s66 = sphi 0, %s66
    %s68 = sphi 0, %s66
    %s69 = sphi 0, %s68
    %s83 = sphi 0, %s69
    %s89 = sphi 0, %s91
    %s92 = sphi 0, %s89
    %s93 = sphi 0, %s92
    %s109 = sphi 0, %s93
    %s115 = sphi 0, %s117
    %s118 = sphi 0, %s115
    %s119 = sphi 0, %s118
    %s135 = sphi 0, %s119
  $region4: #{basic_block_forward.4} parent=0 // loop_header_branch
    %14 = sbr.rel (%p12) target = $region8
  $region5: #{basic_block_forward.4} parent=0 // loop_body
    %s16 = ssub.s32 %s11, 1
    %s17 = ssub.s32 %s11, 2
    %s18 = sadd.s32 %s11, 1
    %s19 = ssub.s32 %s11, %s18
    %p20 = scmp.eq.s32.totalorder %s19, 0
    %s22 = sadd.s32 %s21, 1
    %s23 = scalar_select %p20, %s21, %s22
    %p26 = pneg %p20
    %p27 = scmp.eq.s32.totalorder %s11, 1
    %p28 = por %p26, %p27
    %p29 = scmp.ne.s32.totalorder %s21, %s24
    %p30 = scmp.eq.s32.totalorder %s11, 0
    %p31 = por %p29, %p30
    %p32 = scmp.ne.s32.totalorder %s21, %s24
    %p33 = scmp.eq.s32.totalorder %s16, 1
    %p34 = por %p32, %p33
    %p35 = scmp.ne.s32.totalorder %s24, %s25
    %p36 = scmp.eq.s32.totalorder %s16, 0
    %p37 = por %p35, %p36
    %p38 = scmp.ne.s32.totalorder %s24, %s25
    %p39 = scmp.eq.s32.totalorder %s17, 1
    %p40 = por %p38, %p39
    %p42 = scmp.ne.s32.totalorder %s25, %s41
    %p43 = scmp.eq.s32.totalorder %s17, 0
    %p44 = por %p42, %p43
    %s46 = sadd.s32 %s45, 1
    %p49 = scmp.eq.s32.totalorder %s11, 1
    %p50 = scmp.ne.s32.totalorder %s45, %s47
    %p51 = scmp.eq.s32.totalorder %s11, 0
    %p52 = por %p50, %p51
    %p53 = scmp.ne.s32.totalorder %s45, %s47
    %p54 = scmp.eq.s32.totalorder %s16, 1
    %p55 = por %p53, %p54
    %p56 = scmp.ne.s32.totalorder %s47, %s48
    %p57 = scmp.eq.s32.totalorder %s16, 0
    %p58 = por %p56, %p57
    %p59 = scmp.ne.s32.totalorder %s47, %s48
    %p60 = scmp.eq.s32.totalorder %s17, 1
    %p61 = por %p59, %p60
    %p63 = scmp.ne.s32.totalorder %s48, %s62
    %p64 = scmp.eq.s32.totalorder %s17, 0
    %p65 = por %p63, %p64
    %s67 = sadd.s32 %s66, 1
    %p70 = scmp.eq.s32.totalorder %s11, 1
    %p71 = scmp.ne.s32.totalorder %s66, %s68
    %p72 = scmp.eq.s32.totalorder %s11, 0
    %p73 = por %p71, %p72
    %p74 = scmp.ne.s32.totalorder %s66, %s68
    %p75 = scmp.eq.s32.totalorder %s16, 1
    %p76 = por %p74, %p75
    %p77 = scmp.ne.s32.totalorder %s68, %s69
    %p78 = scmp.eq.s32.totalorder %s16, 0
    %p79 = por %p77, %p78
    %p80 = scmp.ne.s32.totalorder %s68, %s69
    %p81 = scmp.eq.s32.totalorder %s17, 1
    %p82 = por %p80, %p81
    %p84 = scmp.ne.s32.totalorder %s69, %s83
    %p85 = scmp.eq.s32.totalorder %s17, 0
    %p86 = por %p84, %p85
    %s87 = ssub.s32 %s11, %s18
    %p88 = scmp.eq.s32.totalorder %s87, 0
    %s90 = sadd.s32 %s89, 1
    %s91 = scalar_select %p88, %s89, %s90
    %p94 = pneg %p88
    %p95 = scmp.eq.s32.totalorder %s11, 1
    %p96 = por %p94, %p95
    %p97 = scmp.ne.s32.totalorder %s89, %s92
    %p98 = scmp.eq.s32.totalorder %s11, 0
    %p99 = por %p97, %p98
    %p100 = scmp.ne.s32.totalorder %s89, %s92
    %p101 = scmp.eq.s32.totalorder %s16, 1
    %p102 = por %p100, %p101
    %p103 = scmp.ne.s32.totalorder %s92, %s93
    %p104 = scmp.eq.s32.totalorder %s16, 0
    %p105 = por %p103, %p104
    %p106 = scmp.ne.s32.totalorder %s92, %s93
    %p107 = scmp.eq.s32.totalorder %s17, 1
    %p108 = por %p106, %p107
    %p110 = scmp.ne.s32.totalorder %s93, %s109
    %p111 = scmp.eq.s32.totalorder %s17, 0
    %p112 = por %p110, %p111
    %s113 = ssub.s32 %s11, %s18
    %p114 = scmp.eq.s32.totalorder %s113, 0
    %s116 = sadd.s32 %s115, 1
    %s117 = scalar_select %p114, %s115, %s116
    %p120 = pneg %p114
    %p121 = scmp.eq.s32.totalorder %s11, 1
    %p122 = por %p120, %p121
    %p123 = scmp.ne.s32.totalorder %s115, %s118
    %p124 = scmp.eq.s32.totalorder %s11, 0
    %p125 = por %p123, %p124
    %p126 = scmp.ne.s32.totalorder %s115, %s118
    %p127 = scmp.eq.s32.totalorder %s16, 1
    %p128 = por %p126, %p127
    %p129 = scmp.ne.s32.totalorder %s118, %s119
    %p130 = scmp.eq.s32.totalorder %s16, 0
    %p131 = por %p129, %p130
    %p132 = scmp.ne.s32.totalorder %s118, %s119
    %p133 = scmp.eq.s32.totalorder %s17, 1
    %p134 = por %p132, %p133
    %p136 = scmp.ne.s32.totalorder %s119, %s135
    %p137 = scmp.eq.s32.totalorder %s17, 0
    %p138 = por %p136, %p137
    %p139 = scmp.le.s32.totalorder 1, %s11
    %p140 = scmp.lt.s32.totalorder %s11, 3
    %p141 = pnand %p139, %p140
    %p142 = pneg %p141
    // Predicated region
    $region9: #{basic_block_forward.4} parent=5 // pred_check
      _
    $region10: #{basic_block_forward.4} parent=5 // pred_check_branch
      %144 = sbr.rel (%p141) target = $region12
    $region11: #{basic_block_forward.4} parent=5 // pred_region
      %s145 = ssub.s32 %s11, 1
      // Predicated region
      $region13: #{basic_block_forward.4} parent=11 // pred_check
        %p146 = pneg %p58
      $region14: #{basic_block_forward.4} parent=11 // pred_check_branch
        %148 = sbr.rel (%p146) target = $region16
      $region15: #{basic_block_forward.4} parent=11 // pred_region
        _
      $region16: #{basic_block_forward.4} parent=11 // pred_fallthru
        _
      // Predicated region
      $region17: #{basic_block_forward.4} parent=11 // pred_check
        %p149 = pneg %p79
      $region18: #{basic_block_forward.4} parent=11 // pred_check_branch
        %151 = sbr.rel (%p149) target = $region20
      $region19: #{basic_block_forward.4} parent=11 // pred_region
        _
      $region20: #{basic_block_forward.4} parent=11 // pred_fallthru
        _
    $region12: #{basic_block_forward.4} parent=5 // pred_fallthru
      _
    %p152 = scmp.lt.s32.totalorder %s11, 2
    // Predicated region
    $region21: #{basic_block_forward.4} parent=5 // pred_check
      %p153 = pneg %p152
    $region22: #{basic_block_forward.4} parent=5 // pred_check_branch
      %155 = sbr.rel (%p153) target = $region24
    $region23: #{basic_block_forward.4} parent=5 // pred_region
      // Predicated region
      $region25: #{basic_block_forward.4} parent=23 // pred_check
        %p156 = pneg %p31
      $region26: #{basic_block_forward.4} parent=23 // pred_check_branch
        %158 = sbr.rel (%p156) target = $region28
      $region27: #{basic_block_forward.4} parent=23 // pred_region
        %p159 = scmp.lt.s32.totalorder %s11, 1
        %s160 = scalar_select %p159, %s11, 1
        %s161 = smul.addr %s160, 4
        %s162 = scalar_lea.vmem %s0, %s161
      $region28: #{basic_block_forward.4} parent=23 // pred_fallthru
        _
    $region24: #{basic_block_forward.4} parent=5 // pred_fallthru
      _
    %p163 = scmp.le.s32.totalorder 1, %s11
    %p164 = scmp.lt.s32.totalorder %s11, 3
    %p165 = pnand %p163, %p164
    %p166 = pneg %p165
    // Predicated region
    $region29: #{basic_block_forward.4} parent=5 // pred_check
      _
    $region30: #{basic_block_forward.4} parent=5 // pred_check_branch
      %168 = sbr.rel (%p165) target = $region32
    $region31: #{basic_block_forward.4} parent=5 // pred_region
      %s169 = ssub.s32 %s11, 1
      %p170 = scmp.lt.s32.totalorder %s16, 1
      %s171 = scalar_select %p170, %s16, 1
      %s172 = smul.addr %s171, 4
      %s173 = scalar_lea.vmem %s0, %s172
      %p174 = pneg %p37
      %p175 = pneg %p34
      %p176 = pneg %p58
      %p177 = pneg %p55
      %p178 = pneg %p79
      %p179 = pneg %p76
      %p180 = pneg %p105
      %p181 = pneg %p102
      %p182 = scmp.lt.s32.totalorder %s16, 1
      %s183 = scalar_select %p182, %s16, 1
      %s184 = smul.addr %s183, 4
      %s185 = scalar_lea.vmem %s3, %s184
      %p186 = pneg %p131
      %p187 = pneg %p128
      %p188 = scmp.lt.s32.totalorder %s16, 1
      %s189 = scalar_select %p188, %s16, 1
      %s190 = smul.addr %s189, 2
      %s191 = scalar_lea.vmem %s4, %s190
      %p192 = scmp.lt.s32.totalorder %s16, 1
      %s193 = scalar_select %p192, %s16, 1
      %s194 = smul.addr %s193, 4
      %s195 = scalar_lea.vmem %s0, %s194
      %p196 = scmp.lt.s32.totalorder %s16, 1
      %s197 = scalar_select %p196, %s16, 1
      %s198 = smul.addr %s197, 4
      %s199 = scalar_lea.vmem %s3, %s198
      %p200 = scmp.lt.s32.totalorder %s16, 1
      %s201 = scalar_select %p200, %s16, 1
      %s202 = smul.addr %s201, 2
      %s203 = scalar_lea.vmem %s4, %s202
      %v205 = vld [vmem:[%s195] sm:$0xf]
      %v206 = vunpack.c.l.bf16 %v205
      %v207 = vld [vmem:[%s1] sm:$0x1]
      %v208 = vlaneseq
      %v209 = vshrl.u32 %v208, 7
      %v210 = vsub.s32 0, %v209
      %v211 = vrot.slane %v207, %v210
      %v212 = vmul.f32 %v206, %v211
      %v213 = vld [vmem:[%s1 + $0x1] sm:$0x1]
      %v214 = vlaneseq
      %v215 = vshrl.u32 %v214, 7
      %v216 = vsub.s32 0, %v215
      %v217 = vrot.slane %v213, %v216
      %v218 = vadd.f32 %v212, %v217
      %v219 = vmax.f32 %v218, 0.0
      %220 = vst [vmem:[#allocation2] sm:$0xf] 0
      %221 = vst [vmem:[#allocation2 + $0x8] sm:$0xf] 0
      %v222 = vpack.c.bf16 %v219, %v219
      %223 = vst [vmem:[#allocation2 + $0x4] sm:$0xf] %v222
      %v224 = vld [vmem:[#allocation2] sm:$0x8]
      %v225 = vld [vmem:[#allocation2 + $0x4] sm:$0xf]
      %v226 = vld [vmem:[%s2] sm:$0xf]
      %v227 = vld [vmem:[%s2 + $0x4] sm:$0xf]
      %v228 = vld [vmem:[%s2 + $0x8] sm:$0xf]
      %v229 = vld [vmem:[%s2 + $0xc] sm:$0xf]
      %v230 = vld [vmem:[%s2 + $0x10] sm:$0xf]
      %v231 = vld [vmem:[%s2 + $0x14] sm:$0xf]
      %v232 = vld [vmem:[%s2 + $0x18] sm:$0xf]
      %v233 = vld [vmem:[%s2 + $0x1c] sm:$0xf]
      %v234 = vld [vmem:[%s2 + $0x20] sm:$0xf]
      %v235 = vld [vmem:[%s2 + $0x24] sm:$0xf]
      %v236 = vld [vmem:[%s2 + $0x28] sm:$0xf]
      %v237 = vld [vmem:[%s2 + $0x2c] sm:$0xf]
      %v238 = vld [vmem:[%s2 + $0x30] sm:$0xf]
      %v239 = vld [vmem:[%s2 + $0x34] sm:$0xf]
      %v240 = vld [vmem:[%s2 + $0x38] sm:$0xf]
      %v241 = vld [vmem:[%s2 + $0x3c] sm:$0xf]
      %s242 = scalar_lea.vmem %s2, 64
      %v243 = vld [vmem:[%s242] sm:$0xf]
      %v244 = vld [vmem:[%s242 + $0x4] sm:$0xf]
      %v245 = vld [vmem:[%s242 + $0x8] sm:$0xf]
      %v246 = vld [vmem:[%s242 + $0xc] sm:$0xf]
      %v247 = vld [vmem:[%s242 + $0x10] sm:$0xf]
      %v248 = vld [vmem:[%s242 + $0x14] sm:$0xf]
      %v249 = vld [vmem:[%s242 + $0x18] sm:$0xf]
      %v250 = vld [vmem:[%s242 + $0x1c] sm:$0xf]
      %v251 = vld [vmem:[%s242 + $0x20] sm:$0xf]
      %v252 = vld [vmem:[%s242 + $0x24] sm:$0xf]
      %v253 = vld [vmem:[%s242 + $0x28] sm:$0xf]
      %v254 = vld [vmem:[%s242 + $0x2c] sm:$0xf]
      %v255 = vld [vmem:[%s242 + $0x30] sm:$0xf]
      %v256 = vld [vmem:[%s242 + $0x34] sm:$0xf]
      %v257 = vld [vmem:[%s242 + $0x38] sm:$0xf]
      %v258 = vld [vmem:[%s242 + $0x3c] sm:$0xf]
      %v275 = vunpack.c.l.b16 %v243
      %v276 = vunpack.c.l.b16 %v244
      %v277 = vunpack.c.l.b16 %v245
      %v278 = vunpack.c.l.b16 %v246
      %v279 = vunpack.c.l.b16 %v247
      %v280 = vunpack.c.l.b16 %v248
      %v281 = vunpack.c.l.b16 %v249
      %v282 = vunpack.c.l.b16 %v250
      %v283 = vunpack.c.l.b16 %v251
      %v284 = vunpack.c.l.b16 %v252
      %v285 = vunpack.c.l.b16 %v253
      %v286 = vunpack.c.l.b16 %v254
      %v287 = vunpack.c.l.b16 %v255
      %v288 = vunpack.c.l.b16 %v256
      %v289 = vunpack.c.l.b16 %v257
      %v290 = vunpack.c.l.b16 %v258
      %v291 = vpack.c.b16 %v276, %v275
      %v292 = vpack.c.b16 %v278, %v277
      %v293 = vpack.c.b16 %v280, %v279
      %v294 = vpack.c.b16 %v282, %v281
      %v295 = vpack.c.b16 %v284, %v283
      %v296 = vpack.c.b16 %v286, %v285
      %v297 = vpack.c.b16 %v288, %v287
      %v298 = vpack.c.b16 %v290, %v289
      %307 = vmatprep.subr.bf16.mxu0 0
      %308 = vmatpush1.bf16.msra.mxu0 %v291
      %309 = vmatprep.subr.bf16.mxu0 0
      %310 = vmatpush1.bf16.msra.mxu0 %v292
      %311 = vmatprep.subr.bf16.mxu0 0
      %312 = vmatpush1.bf16.msra.mxu0 %v293
      %313 = vmatprep.subr.bf16.mxu0 0
      %314 = vmatpush1.bf16.msra.mxu0 %v294
      %315 = vmatprep.subr.bf16.mxu0 0
      %316 = vmatpush1.bf16.msra.mxu0 %v295
      %317 = vmatprep.subr.bf16.mxu0 0
      %318 = vmatpush1.bf16.msra.mxu0 %v296
      %319 = vmatprep.subr.bf16.mxu0 0
      %320 = vmatpush1.bf16.msra.mxu0 %v297
      %321 = vmatprep.subr.bf16.mxu0 0
      %322 = vmatpush1.bf16.msra.mxu0 %v298
      %323 = vmatprep.subr.bf16.mxu0 0
      %324 = vmatpush1.bf16.msra.mxu0 0
      %325 = vmatprep.subr.bf16.mxu0 0
      %326 = vmatpush1.bf16.msra.mxu0 0
      %327 = vmatprep.subr.bf16.mxu0 0
      %328 = vmatpush1.bf16.msra.mxu0 0
      %329 = vmatprep.subr.bf16.mxu0 0
      %330 = vmatpush1.bf16.msra.mxu0 0
      %331 = vmatprep.subr.bf16.mxu0 0
      %332 = vmatpush1.bf16.msra.mxu0 0
      %333 = vmatprep.subr.bf16.mxu0 0
      %334 = vmatpush1.bf16.msra.mxu0 0
      %335 = vmatprep.subr.bf16.mxu0 0
      %336 = vmatpush1.bf16.msra.mxu0 0
      %337 = vmatprep.subr.bf16.mxu0 0
      %338 = vmatpush1.bf16.msra.mxu0 0
      %339 = vmatprep.mubr.bf16.mxu0 0
      %340 = vmatmul.mubr.bf16.gmra.mrb[0].mxu0 %v225
      %v341 = vpop.f32.mrb[0].mxu0
      %v342 = vadd.f32 0.0, %v341
      %v343 = vpop.f32.mrb[0].mxu0
      %v344 = vpop.f32.mrb[0].mxu0
      %v345 = vpop.f32.mrb[0].mxu0
      %346 = vdwg.mxu0
      %v349 = vunpack.c.l.b16 %v224
      %v350 = vunpack.c.l.b16 %v225
      %v351 = vpack.c.b16 %v350, %v349
      %v353 = vshrl.u32 %v351, 16
      %v355 = vrot.slane %v353, 3
      %v356 = vshll.u32 %v351, 16
      %v358 = vrot.slane %v356, 4
      %v359 = vor.u32 %v355, %v358
      %v377 = vunpack.c.l.b16 %v226
      %v378 = vunpack.c.l.b16 %v227
      %v379 = vunpack.c.l.b16 %v228
      %v380 = vunpack.c.l.b16 %v229
      %v381 = vunpack.c.l.b16 %v230
      %v382 = vunpack.c.l.b16 %v231
      %v383 = vunpack.c.l.b16 %v232
      %v384 = vunpack.c.l.b16 %v233
      %v385 = vunpack.c.l.b16 %v234
      %v386 = vunpack.c.l.b16 %v235
      %v387 = vunpack.c.l.b16 %v236
      %v388 = vunpack.c.l.b16 %v237
      %v389 = vunpack.c.l.b16 %v238
      %v390 = vunpack.c.l.b16 %v239
      %v391 = vunpack.c.l.b16 %v240
      %v392 = vunpack.c.l.b16 %v241
      %v393 = vpack.c.b16 %v378, %v377
      %v394 = vpack.c.b16 %v380, %v379
      %v395 = vpack.c.b16 %v382, %v381
      %v396 = vpack.c.b16 %v384, %v383
      %v397 = vpack.c.b16 %v386, %v385
      %v398 = vpack.c.b16 %v388, %v387
      %v399 = vpack.c.b16 %v390, %v389
      %v400 = vpack.c.b16 %v392, %v391
      %409 = vmatprep.subr.bf16.mxu0 0
      %410 = vmatpush1.bf16.msra.mxu0 %v393
      %411 = vmatprep.subr.bf16.mxu0 0
      %412 = vmatpush1.bf16.msra.mxu0 %v394
      %413 = vmatprep.subr.bf16.mxu0 0
      %414 = vmatpush1.bf16.msra.mxu0 %v395
      %415 = vmatprep.subr.bf16.mxu0 0
      %416 = vmatpush1.bf16.msra.mxu0 %v396
      %417 = vmatprep.subr.bf16.mxu0 0
      %418 = vmatpush1.bf16.msra.mxu0 %v397
      %419 = vmatprep.subr.bf16.mxu0 0
      %420 = vmatpush1.bf16.msra.mxu0 %v398
      %421 = vmatprep.subr.bf16.mxu0 0
      %422 = vmatpush1.bf16.msra.mxu0 %v399
      %423 = vmatprep.subr.bf16.mxu0 0
      %424 = vmatpush1.bf16.msra.mxu0 %v400
      %425 = vmatprep.subr.bf16.mxu0 0
      %426 = vmatpush1.bf16.msra.mxu0 0
      %427 = vmatprep.subr.bf16.mxu0 0
      %428 = vmatpush1.bf16.msra.mxu0 0
      %429 = vmatprep.subr.bf16.mxu0 0
      %430 = vmatpush1.bf16.msra.mxu0 0
      %431 = vmatprep.subr.bf16.mxu0 0
      %432 = vmatpush1.bf16.msra.mxu0 0
      %433 = vmatprep.subr.bf16.mxu0 0
      %434 = vmatpush1.bf16.msra.mxu0 0
      %435 = vmatprep.subr.bf16.mxu0 0
      %436 = vmatpush1.bf16.msra.mxu0 0
      %437 = vmatprep.subr.bf16.mxu0 0
      %438 = vmatpush1.bf16.msra.mxu0 0
      %439 = vmatprep.subr.bf16.mxu0 0
      %440 = vmatpush1.bf16.msra.mxu0 0
      %441 = vmatprep.mubr.bf16.mxu0 0
      %442 = vmatmul.mubr.bf16.gmra.mrb[0].mxu0 %v359
      %v443 = vpop.f32.mrb[0].mxu0
      %v444 = vadd.f32 %v342, %v443
      %v445 = vpop.f32.mrb[0].mxu0
      %v446 = vpop.f32.mrb[0].mxu0
      %v447 = vpop.f32.mrb[0].mxu0
      %448 = vdwg.mxu0
      %v449 = vld [vmem:[#allocation2 + $0x4] sm:$0xf]
      %v450 = vld [vmem:[#allocation2 + $0x8] sm:$0x1]
      %s451 = scalar_lea.vmem %s2, 128
      %v452 = vld [vmem:[%s451] sm:$0xf]
      %v453 = vld [vmem:[%s451 + $0x4] sm:$0xf]
      %v454 = vld [vmem:[%s451 + $0x8] sm:$0xf]
      %v455 = vld [vmem:[%s451 + $0xc] sm:$0xf]
      %v456 = vld [vmem:[%s451 + $0x10] sm:$0xf]
      %v457 = vld [vmem:[%s451 + $0x14] sm:$0xf]
      %v458 = vld [vmem:[%s451 + $0x18] sm:$0xf]
      %v459 = vld [vmem:[%s451 + $0x1c] sm:$0xf]
      %v460 = vld [vmem:[%s451 + $0x20] sm:$0xf]
      %v461 = vld [vmem:[%s451 + $0x24] sm:$0xf]
      %v462 = vld [vmem:[%s451 + $0x28] sm:$0xf]
      %v463 = vld [vmem:[%s451 + $0x2c] sm:$0xf]
      %v464 = vld [vmem:[%s451 + $0x30] sm:$0xf]
      %v465 = vld [vmem:[%s451 + $0x34] sm:$0xf]
      %v466 = vld [vmem:[%s451 + $0x38] sm:$0xf]
      %v467 = vld [vmem:[%s451 + $0x3c] sm:$0xf]
      %v470 = vunpack.c.l.b16 %v449
      %v471 = vunpack.c.l.b16 %v450
      %v472 = vpack.c.b16 %v471, %v470
      %v474 = vshrl.u32 %v472, 16
      %v476 = vshll.u32 %v472, 16
      %v478 = vrot.slane %v476, 1
      %v479 = vor.u32 %v474, %v478
      %v497 = vunpack.c.l.b16 %v452
      %v498 = vunpack.c.l.b16 %v453
      %v499 = vunpack.c.l.b16 %v454
      %v500 = vunpack.c.l.b16 %v455
      %v501 = vunpack.c.l.b16 %v456
      %v502 = vunpack.c.l.b16 %v457
      %v503 = vunpack.c.l.b16 %v458
      %v504 = vunpack.c.l.b16 %v459
      %v505 = vunpack.c.l.b16 %v460
      %v506 = vunpack.c.l.b16 %v461
      %v507 = vunpack.c.l.b16 %v462
      %v508 = vunpack.c.l.b16 %v463
      %v509 = vunpack.c.l.b16 %v464
      %v510 = vunpack.c.l.b16 %v465
      %v511 = vunpack.c.l.b16 %v466
      %v512 = vunpack.c.l.b16 %v467
      %v513 = vpack.c.b16 %v498, %v497
      %v514 = vpack.c.b16 %v500, %v499
      %v515 = vpack.c.b16 %v502, %v501
      %v516 = vpack.c.b16 %v504, %v503
      %v517 = vpack.c.b16 %v506, %v505
      %v518 = vpack.c.b16 %v508, %v507
      %v519 = vpack.c.b16 %v510, %v509
      %v520 = vpack.c.b16 %v512, %v511
      %529 = vmatprep.subr.bf16.mxu0 0
      %530 = vmatpush1.bf16.msra.mxu0 %v513
      %531 = vmatprep.subr.bf16.mxu0 0
      %532 = vmatpush1.bf16.msra.mxu0 %v514
      %533 = vmatprep.subr.bf16.mxu0 0
      %534 = vmatpush1.bf16.msra.mxu0 %v515
      %535 = vmatprep.subr.bf16.mxu0 0
      %536 = vmatpush1.bf16.msra.mxu0 %v516
      %537 = vmatprep.subr.bf16.mxu0 0
      %538 = vmatpush1.bf16.msra.mxu0 %v517
      %539 = vmatprep.subr.bf16.mxu0 0
      %540 = vmatpush1.bf16.msra.mxu0 %v518
      %541 = vmatprep.subr.bf16.mxu0 0
      %542 = vmatpush1.bf16.msra.mxu0 %v519
      %543 = vmatprep.subr.bf16.mxu0 0
      %544 = vmatpush1.bf16.msra.mxu0 %v520
      %545 = vmatprep.subr.bf16.mxu0 0
      %546 = vmatpush1.bf16.msra.mxu0 0
      %547 = vmatprep.subr.bf16.mxu0 0
      %548 = vmatpush1.bf16.msra.mxu0 0
      %549 = vmatprep.subr.bf16.mxu0 0
      %550 = vmatpush1.bf16.msra.mxu0 0
      %551 = vmatprep.subr.bf16.mxu0 0
      %552 = vmatpush1.bf16.msra.mxu0 0
      %553 = vmatprep.subr.bf16.mxu0 0
      %554 = vmatpush1.bf16.msra.mxu0 0
      %555 = vmatprep.subr.bf16.mxu0 0
      %556 = vmatpush1.bf16.msra.mxu0 0
      %557 = vmatprep.subr.bf16.mxu0 0
      %558 = vmatpush1.bf16.msra.mxu0 0
      %559 = vmatprep.subr.bf16.mxu0 0
      %560 = vmatpush1.bf16.msra.mxu0 0
      %561 = vmatprep.mubr.bf16.mxu0 0
      %562 = vmatmul.mubr.bf16.gmra.mrb[0].mxu0 %v479
      %v563 = vpop.f32.mrb[0].mxu0
      %v564 = vadd.f32 0.0, %v563
      %v565 = vpop.f32.mrb[0].mxu0
      %v566 = vpop.f32.mrb[0].mxu0
      %v567 = vpop.f32.mrb[0].mxu0
      %568 = vdwg.mxu0
      %v569 = vadd.f32 %v444, %v564
      %v570 = vpack.c.bf16 %v569, %v569
      %571 = vst [vmem:[%s199] sm:$0xf] %v570
      %v572 = vrot.slane %v569, 4
      %v573 = vadd.f32 %v569, %v572
      %v574 = vrot.slane %v573, 2
      %v575 = vadd.f32 %v573, %v574
      %v576 = vrot.slane %v575, 1
      %v577 = vadd.f32 %v575, %v576
      %v578 = vmul.f32 %v569, %v569
      %v579 = vrot.slane %v578, 4
      %v580 = vadd.f32 %v578, %v579
      %v581 = vrot.slane %v580, 2
      %v582 = vadd.f32 %v580, %v581
      %v583 = vrot.slane %v582, 1
      %v584 = vadd.f32 %v582, %v583
      %vm585 = vcmask 1040384
      %v586 = vsel %vm585, %v577, %v584
      %587 = vst [vmem:[%s203] sm:$0x3] %v586
      %p588 = scmp.lt.s32.totalorder %s16, 1
      %s589 = scalar_select %p588, %s16, 1
      %s590 = smul.addr %s589, 4
      %s591 = scalar_lea.vmem %s3, %s590
      %p592 = scmp.lt.s32.totalorder %s16, 1
      %s593 = scalar_select %p592, %s16, 1
      %s594 = smul.addr %s593, 2
      %s595 = scalar_lea.vmem %s4, %s594
      // Predicated region
      $region33: #{basic_block_forward.4} parent=31 // pred_check
        %p596 = pneg %p102
      $region34: #{basic_block_forward.4} parent=31 // pred_check_branch
        %598 = sbr.rel (%p596) target = $region36
      $region35: #{basic_block_forward.4} parent=31 // pred_region
        _
      $region36: #{basic_block_forward.4} parent=31 // pred_fallthru
        _
      // Predicated region
      $region37: #{basic_block_forward.4} parent=31 // pred_check
        %p599 = pneg %p128
      $region38: #{basic_block_forward.4} parent=31 // pred_check_branch
        %601 = sbr.rel (%p599) target = $region40
      $region39: #{basic_block_forward.4} parent=31 // pred_region
        _
      $region40: #{basic_block_forward.4} parent=31 // pred_fallthru
        _
    $region32: #{basic_block_forward.4} parent=5 // pred_fallthru
      _
    %p602 = scmp.le.s32.totalorder 2, %s11
    // Predicated region
    $region41: #{basic_block_forward.4} parent=5 // pred_check
      %p603 = pneg %p602
    $region42: #{basic_block_forward.4} parent=5 // pred_check_branch
      %605 = sbr.rel (%p603) target = $region44
    $region43: #{basic_block_forward.4} parent=5 // pred_region
      %s606 = ssub.s32 %s11, 2
      // Predicated region
      $region45: #{basic_block_forward.4} parent=43 // pred_check
        %p607 = pneg %p108
      $region46: #{basic_block_forward.4} parent=43 // pred_check_branch
        %609 = sbr.rel (%p607) target = $region48
      $region47: #{basic_block_forward.4} parent=43 // pred_region
        %p610 = scmp.lt.s32.totalorder %s17, 1
        %s611 = scalar_select %p610, %s17, 1
        %s612 = smul.addr %s611, 4
        %s613 = scalar_lea.vmem %s3, %s612
      $region48: #{basic_block_forward.4} parent=43 // pred_fallthru
        _
      // Predicated region
      $region49: #{basic_block_forward.4} parent=43 // pred_check
        %p614 = pneg %p134
      $region50: #{basic_block_forward.4} parent=43 // pred_check_branch
        %616 = sbr.rel (%p614) target = $region52
      $region51: #{basic_block_forward.4} parent=43 // pred_region
        %p617 = scmp.lt.s32.totalorder %s17, 1
        %s618 = scalar_select %p617, %s17, 1
        %s619 = smul.addr %s618, 2
        %s620 = scalar_lea.vmem %s4, %s619
      $region52: #{basic_block_forward.4} parent=43 // pred_fallthru
        _
    $region44: #{basic_block_forward.4} parent=5 // pred_fallthru
      _
  $region6: #{basic_block_forward.4} parent=0 // loop_footer
    %s15 = sadd.s32 1, %s11
  $region7: #{basic_block_forward.4} parent=0 // loop_footer_branch
    %10 = sbr.rel target = $region3
  $region8: #{basic_block_forward.4} parent=0 // loop_exit
    _

// kernel: basic_block_forward.3
$region0: #{basic_block_forward.3}
  #allocation0 [shape = 'u32[]', space=smem, size = 0x4, offset = 0x4, fixed_abs, tag = 'smem constant byte address 0x4 - core index']
  #allocation1 [shape = 'u32[144,128]{1,0:T(1,128)}', space=vmem, size = 0x12000, scoped, tag = 'internal scratch']
  %s0 = inlined_call_operand.vmem [shape: bf16[2,2,16,128], index: 0, kind: input, shape index: {}]
  %s1 = inlined_call_operand.vmem [shape: bf16[3,128,128], index: 1, kind: input, shape index: {}]
  %s2 = inlined_call_operand.vmem [shape: bf16[128,128], index: 2, kind: input, shape index: {}]
  %s3 = inlined_call_operand.vmem [shape: bf16[2,8,128], index: 3, kind: output, shape index: {0}]
  %s4 = inlined_call_operand.vmem [shape: f32[2,2,128], index: 4, kind: output, shape index: {1}]
  %s5 = inlined_call_operand.vmem [shape: bf16[2,8,128], index: 5, kind: output, shape index: {2}]
  %s6 = inlined_call_operand.vmem [shape: f32[2,2,128], index: 6, kind: output, shape index: {3}]
  %7 = xla_tuple %s3, %s4, %s5, %s6
  %s8 = sld [smem:[#allocation0]]
  $region69: #{basic_block_forward.3} parent=0
    _
  %s10 = ssub.s32 1, %s8
  %s11 = scalar_select 0, %s10, %s8
  loop: start=0, step=1, limit=4
  $region2: #{basic_block_forward.3} parent=0 // loop_pre_header
    _
  $region3: #{basic_block_forward.3} parent=0 // loop_header
    %s13 = sphi 0, %s17
    %p14 = scmp.ge.s32.totalorder %s13, 4
    %s23 = sphi 0, %s25
    %s26 = sphi 0, %s23
    %s27 = sphi 0, %s26
    %s43 = sphi 0, %s27
    %s47 = sphi 0, %s47
    %s49 = sphi 0, %s47
    %s50 = sphi 0, %s49
    %s64 = sphi 0, %s50
    %s68 = sphi 0, %s68
    %s70 = sphi 0, %s68
    %s71 = sphi 0, %s70
    %s85 = sphi 0, %s71
    %s91 = sphi 0, %s93
    %s94 = sphi 0, %s91
    %s95 = sphi 0, %s94
    %s111 = sphi 0, %s95
    %s117 = sphi 0, %s119
    %s120 = sphi 0, %s117
    %s121 = sphi 0, %s120
    %s137 = sphi 0, %s121
    %s143 = sphi 0, %s145
    %s146 = sphi 0, %s143
    %s147 = sphi 0, %s146
    %s163 = sphi 0, %s147
    %s169 = sphi 0, %s171
    %s172 = sphi 0, %s169
    %s173 = sphi 0, %s172
    %s189 = sphi 0, %s173
  $region4: #{basic_block_forward.3} parent=0 // loop_header_branch
    %16 = sbr.rel (%p14) target = $region8
  $region5: #{basic_block_forward.3} parent=0 // loop_body
    %s18 = ssub.s32 %s13, 1
    %s19 = ssub.s32 %s13, 2
    %s20 = sadd.s32 %s13, 1
    %s21 = ssub.s32 %s13, %s20
    %p22 = scmp.eq.s32.totalorder %s21, 0
    %s24 = sadd.s32 %s23, 1
    %s25 = scalar_select %p22, %s23, %s24
    %p28 = pneg %p22
    %p29 = scmp.eq.s32.totalorder %s13, 1
    %p30 = por %p28, %p29
    %p31 = scmp.ne.s32.totalorder %s23, %s26
    %p32 = scmp.eq.s32.totalorder %s13, 0
    %p33 = por %p31, %p32
    %p34 = scmp.ne.s32.totalorder %s23, %s26
    %p35 = scmp.eq.s32.totalorder %s18, 1
    %p36 = por %p34, %p35
    %p37 = scmp.ne.s32.totalorder %s26, %s27
    %p38 = scmp.eq.s32.totalorder %s18, 0
    %p39 = por %p37, %p38
    %p40 = scmp.ne.s32.totalorder %s26, %s27
    %p41 = scmp.eq.s32.totalorder %s19, 1
    %p42 = por %p40, %p41
    %p44 = scmp.ne.s32.totalorder %s27, %s43
    %p45 = scmp.eq.s32.totalorder %s19, 0
    %p46 = por %p44, %p45
    %s48 = sadd.s32 %s47, 1
    %p51 = scmp.eq.s32.totalorder %s13, 1
    %p52 = scmp.ne.s32.totalorder %s47, %s49
    %p53 = scmp.eq.s32.totalorder %s13, 0
    %p54 = por %p52, %p53
    %p55 = scmp.ne.s32.totalorder %s47, %s49
    %p56 = scmp.eq.s32.totalorder %s18, 1
    %p57 = por %p55, %p56
    %p58 = scmp.ne.s32.totalorder %s49, %s50
    %p59 = scmp.eq.s32.totalorder %s18, 0
    %p60 = por %p58, %p59
    %p61 = scmp.ne.s32.totalorder %s49, %s50
    %p62 = scmp.eq.s32.totalorder %s19, 1
    %p63 = por %p61, %p62
    %p65 = scmp.ne.s32.totalorder %s50, %s64
    %p66 = scmp.eq.s32.totalorder %s19, 0
    %p67 = por %p65, %p66
    %s69 = sadd.s32 %s68, 1
    %p72 = scmp.eq.s32.totalorder %s13, 1
    %p73 = scmp.ne.s32.totalorder %s68, %s70
    %p74 = scmp.eq.s32.totalorder %s13, 0
    %p75 = por %p73, %p74
    %p76 = scmp.ne.s32.totalorder %s68, %s70
    %p77 = scmp.eq.s32.totalorder %s18, 1
    %p78 = por %p76, %p77
    %p79 = scmp.ne.s32.totalorder %s70, %s71
    %p80 = scmp.eq.s32.totalorder %s18, 0
    %p81 = por %p79, %p80
    %p82 = scmp.ne.s32.totalorder %s70, %s71
    %p83 = scmp.eq.s32.totalorder %s19, 1
    %p84 = por %p82, %p83
    %p86 = scmp.ne.s32.totalorder %s71, %s85
    %p87 = scmp.eq.s32.totalorder %s19, 0
    %p88 = por %p86, %p87
    %s89 = ssub.s32 %s13, %s20
    %p90 = scmp.eq.s32.totalorder %s89, 0
    %s92 = sadd.s32 %s91, 1
    %s93 = scalar_select %p90, %s91, %s92
    %p96 = pneg %p90
    %p97 = scmp.eq.s32.totalorder %s13, 1
    %p98 = por %p96, %p97
    %p99 = scmp.ne.s32.totalorder %s91, %s94
    %p100 = scmp.eq.s32.totalorder %s13, 0
    %p101 = por %p99, %p100
    %p102 = scmp.ne.s32.totalorder %s91, %s94
    %p103 = scmp.eq.s32.totalorder %s18, 1
    %p104 = por %p102, %p103
    %p105 = scmp.ne.s32.totalorder %s94, %s95
    %p106 = scmp.eq.s32.totalorder %s18, 0
    %p107 = por %p105, %p106
    %p108 = scmp.ne.s32.totalorder %s94, %s95
    %p109 = scmp.eq.s32.totalorder %s19, 1
    %p110 = por %p108, %p109
    %p112 = scmp.ne.s32.totalorder %s95, %s111
    %p113 = scmp.eq.s32.totalorder %s19, 0
    %p114 = por %p112, %p113
    %s115 = ssub.s32 %s13, %s20
    %p116 = scmp.eq.s32.totalorder %s115, 0
    %s118 = sadd.s32 %s117, 1
    %s119 = scalar_select %p116, %s117, %s118
    %p122 = pneg %p116
    %p123 = scmp.eq.s32.totalorder %s13, 1
    %p124 = por %p122, %p123
    %p125 = scmp.ne.s32.totalorder %s117, %s120
    %p126 = scmp.eq.s32.totalorder %s13, 0
    %p127 = por %p125, %p126
    %p128 = scmp.ne.s32.totalorder %s117, %s120
    %p129 = scmp.eq.s32.totalorder %s18, 1
    %p130 = por %p128, %p129
    %p131 = scmp.ne.s32.totalorder %s120, %s121
    %p132 = scmp.eq.s32.totalorder %s18, 0
    %p133 = por %p131, %p132
    %p134 = scmp.ne.s32.totalorder %s120, %s121
    %p135 = scmp.eq.s32.totalorder %s19, 1
    %p136 = por %p134, %p135
    %p138 = scmp.ne.s32.totalorder %s121, %s137
    %p139 = scmp.eq.s32.totalorder %s19, 0
    %p140 = por %p138, %p139
    %s141 = ssub.s32 %s13, %s20
    %p142 = scmp.eq.s32.totalorder %s141, 0
    %s144 = sadd.s32 %s143, 1
    %s145 = scalar_select %p142, %s143, %s144
    %p148 = pneg %p142
    %p149 = scmp.eq.s32.totalorder %s13, 1
    %p150 = por %p148, %p149
    %p151 = scmp.ne.s32.totalorder %s143, %s146
    %p152 = scmp.eq.s32.totalorder %s13, 0
    %p153 = por %p151, %p152
    %p154 = scmp.ne.s32.totalorder %s143, %s146
    %p155 = scmp.eq.s32.totalorder %s18, 1
    %p156 = por %p154, %p155
    %p157 = scmp.ne.s32.totalorder %s146, %s147
    %p158 = scmp.eq.s32.totalorder %s18, 0
    %p159 = por %p157, %p158
    %p160 = scmp.ne.s32.totalorder %s146, %s147
    %p161 = scmp.eq.s32.totalorder %s19, 1
    %p162 = por %p160, %p161
    %p164 = scmp.ne.s32.totalorder %s147, %s163
    %p165 = scmp.eq.s32.totalorder %s19, 0
    %p166 = por %p164, %p165
    %s167 = ssub.s32 %s13, %s20
    %p168 = scmp.eq.s32.totalorder %s167, 0
    %s170 = sadd.s32 %s169, 1
    %s171 = scalar_select %p168, %s169, %s170
    %p174 = pneg %p168
    %p175 = scmp.eq.s32.totalorder %s13, 1
    %p176 = por %p174, %p175
    %p177 = scmp.ne.s32.totalorder %s169, %s172
    %p178 = scmp.eq.s32.totalorder %s13, 0
    %p179 = por %p177, %p178
    %p180 = scmp.ne.s32.totalorder %s169, %s172
    %p181 = scmp.eq.s32.totalorder %s18, 1
    %p182 = por %p180, %p181
    %p183 = scmp.ne.s32.totalorder %s172, %s173
    %p184 = scmp.eq.s32.totalorder %s18, 0
    %p185 = por %p183, %p184
    %p186 = scmp.ne.s32.totalorder %s172, %s173
    %p187 = scmp.eq.s32.totalorder %s19, 1
    %p188 = por %p186, %p187
    %p190 = scmp.ne.s32.totalorder %s173, %s189
    %p191 = scmp.eq.s32.totalorder %s19, 0
    %p192 = por %p190, %p191
    %p193 = scmp.le.s32.totalorder 1, %s13
    %p194 = scmp.lt.s32.totalorder %s13, 3
    %p195 = pnand %p193, %p194
    %p196 = pneg %p195
    // Predicated region
    $region9: #{basic_block_forward.3} parent=5 // pred_check
      _
    $region10: #{basic_block_forward.3} parent=5 // pred_check_branch
      %198 = sbr.rel (%p195) target = $region12
    $region11: #{basic_block_forward.3} parent=5 // pred_region
      %s199 = ssub.s32 %s13, 1
      // Predicated region
      $region13: #{basic_block_forward.3} parent=11 // pred_check
        %p200 = pneg %p60
      $region14: #{basic_block_forward.3} parent=11 // pred_check_branch
        %202 = sbr.rel (%p200) target = $region16
      $region15: #{basic_block_forward.3} parent=11 // pred_region
        _
      $region16: #{basic_block_forward.3} parent=11 // pred_fallthru
        _
      // Predicated region
      $region17: #{basic_block_forward.3} parent=11 // pred_check
        %p203 = pneg %p81
      $region18: #{basic_block_forward.3} parent=11 // pred_check_branch
        %205 = sbr.rel (%p203) target = $region20
      $region19: #{basic_block_forward.3} parent=11 // pred_region
        _
      $region20: #{basic_block_forward.3} parent=11 // pred_fallthru
        _
    $region12: #{basic_block_forward.3} parent=5 // pred_fallthru
      _
    %p206 = scmp.lt.s32.totalorder %s13, 2
    // Predicated region
    $region21: #{basic_block_forward.3} parent=5 // pred_check
      %p207 = pneg %p206
    $region22: #{basic_block_forward.3} parent=5 // pred_check_branch
      %209 = sbr.rel (%p207) target = $region24
    $region23: #{basic_block_forward.3} parent=5 // pred_region
      // Predicated region
      $region25: #{basic_block_forward.3} parent=23 // pred_check
        %p210 = pneg %p33
      $region26: #{basic_block_forward.3} parent=23 // pred_check_branch
        %212 = sbr.rel (%p210) target = $region28
      $region27: #{basic_block_forward.3} parent=23 // pred_region
        %p213 = scmp.lt.s32.totalorder %s13, 1
        %s214 = scalar_select %p213, %s13, 1
        %s215 = smul.addr %s214, 4
        %s216 = smul.addr %s215, 4
        %s217 = scalar_lea.vmem %s0, %s216
      $region28: #{basic_block_forward.3} parent=23 // pred_fallthru
        _
    $region24: #{basic_block_forward.3} parent=5 // pred_fallthru
      _
    %p218 = scmp.le.s32.totalorder 1, %s13
    %p219 = scmp.lt.s32.totalorder %s13, 3
    %p220 = pnand %p218, %p219
    %p221 = pneg %p220
    // Predicated region
    $region29: #{basic_block_forward.3} parent=5 // pred_check
      _
    $region30: #{basic_block_forward.3} parent=5 // pred_check_branch
      %223 = sbr.rel (%p220) target = $region32
    $region31: #{basic_block_forward.3} parent=5 // pred_region
      %s224 = ssub.s32 %s13, 1
      %p225 = scmp.lt.s32.totalorder %s18, 1
      %s226 = scalar_select %p225, %s18, 1
      %s227 = smul.addr %s226, 4
      %s228 = smul.addr %s227, 4
      %s229 = scalar_lea.vmem %s0, %s228
      %p230 = pneg %p39
      %p231 = pneg %p36
      %p232 = pneg %p60
      %p233 = pneg %p57
      %p234 = pneg %p81
      %p235 = pneg %p78
      %p236 = pneg %p107
      %p237 = pneg %p104
      %p238 = scmp.lt.s32.totalorder %s18, 1
      %s239 = scalar_select %p238, %s18, 1
      %s240 = smul.addr %s239, 4
      %s241 = scalar_lea.vmem %s3, %s240
      %p242 = pneg %p133
      %p243 = pneg %p130
      %p244 = scmp.lt.s32.totalorder %s18, 1
      %s245 = scalar_select %p244, %s18, 1
      %s246 = smul.addr %s245, 2
      %s247 = scalar_lea.vmem %s4, %s246
      %p248 = pneg %p159
      %p249 = pneg %p156
      %p250 = scmp.lt.s32.totalorder %s18, 1
      %s251 = scalar_select %p250, %s18, 1
      %s252 = smul.addr %s251, 4
      %s253 = scalar_lea.vmem %s5, %s252
      %p254 = pneg %p185
      %p255 = pneg %p182
      %p256 = scmp.lt.s32.totalorder %s18, 1
      %s257 = scalar_select %p256, %s18, 1
      %s258 = smul.addr %s257, 2
      %s259 = scalar_lea.vmem %s6, %s258
      %p260 = scmp.lt.s32.totalorder %s18, 1
      %s261 = scalar_select %p260, %s18, 1
      %s262 = smul.addr %s261, 4
      %s263 = smul.addr %s262, 4
      %s264 = scalar_lea.vmem %s0, %s263
      %p265 = scmp.lt.s32.totalorder %s18, 1
      %s266 = scalar_select %p265, %s18, 1
      %s267 = smul.addr %s266, 4
      %s268 = scalar_lea.vmem %s3, %s267
      %p269 = scmp.lt.s32.totalorder %s18, 1
      %s270 = scalar_select %p269, %s18, 1
      %s271 = smul.addr %s270, 2
      %s272 = scalar_lea.vmem %s4, %s271
      %p273 = scmp.lt.s32.totalorder %s18, 1
      %s274 = scalar_select %p273, %s18, 1
      %s275 = smul.addr %s274, 4
      %s276 = scalar_lea.vmem %s5, %s275
      %p277 = scmp.lt.s32.totalorder %s18, 1
      %s278 = scalar_select %p277, %s18, 1
      %s279 = smul.addr %s278, 2
      %s280 = scalar_lea.vmem %s6, %s279
      %v282 = vld [vmem:[%s264] sm:$0xf]
      %v283 = vld [vmem:[%s1] sm:$0xf]
      %v284 = vld [vmem:[%s1 + $0x4] sm:$0xf]
      %v285 = vld [vmem:[%s1 + $0x8] sm:$0xf]
      %v286 = vld [vmem:[%s1 + $0xc] sm:$0xf]
      %v287 = vld [vmem:[%s1 + $0x10] sm:$0xf]
      %v288 = vld [vmem:[%s1 + $0x14] sm:$0xf]
      %v289 = vld [vmem:[%s1 + $0x18] sm:$0xf]
      %v290 = vld [vmem:[%s1 + $0x1c] sm:$0xf]
      %v291 = vld [vmem:[%s1 + $0x20] sm:$0xf]
      %v292 = vld [vmem:[%s1 + $0x24] sm:$0xf]
      %v293 = vld [vmem:[%s1 + $0x28] sm:$0xf]
      %v294 = vld [vmem:[%s1 + $0x2c] sm:$0xf]
      %v295 = vld [vmem:[%s1 + $0x30] sm:$0xf]
      %v296 = vld [vmem:[%s1 + $0x34] sm:$0xf]
      %v297 = vld [vmem:[%s1 + $0x38] sm:$0xf]
      %v298 = vld [vmem:[%s1 + $0x3c] sm:$0xf]
      %s299 = scalar_lea.vmem %s264, 8
      %v300 = vld [vmem:[%s299] sm:$0xf]
      %s301 = scalar_lea.vmem %s1, 64
      %v302 = vld [vmem:[%s301] sm:$0xf]
      %v303 = vld [vmem:[%s301 + $0x4] sm:$0xf]
      %v304 = vld [vmem:[%s301 + $0x8] sm:$0xf]
      %v305 = vld [vmem:[%s301 + $0xc] sm:$0xf]
      %v306 = vld [vmem:[%s301 + $0x10] sm:$0xf]
      %v307 = vld [vmem:[%s301 + $0x14] sm:$0xf]
      %v308 = vld [vmem:[%s301 + $0x18] sm:$0xf]
      %v309 = vld [vmem:[%s301 + $0x1c] sm:$0xf]
      %v310 = vld [vmem:[%s301 + $0x20] sm:$0xf]
      %v311 = vld [vmem:[%s301 + $0x24] sm:$0xf]
      %v312 = vld [vmem:[%s301 + $0x28] sm:$0xf]
      %v313 = vld [vmem:[%s301 + $0x2c] sm:$0xf]
      %v314 = vld [vmem:[%s301 + $0x30] sm:$0xf]
      %v315 = vld [vmem:[%s301 + $0x34] sm:$0xf]
      %v316 = vld [vmem:[%s301 + $0x38] sm:$0xf]
      %v317 = vld [vmem:[%s301 + $0x3c] sm:$0xf]
      %v334 = vunpack.c.l.b16 %v302
      %v335 = vunpack.c.l.b16 %v303
      %v336 = vunpack.c.l.b16 %v304
      %v337 = vunpack.c.l.b16 %v305
      %v338 = vunpack.c.l.b16 %v306
      %v339 = vunpack.c.l.b16 %v307
      %v340 = vunpack.c.l.b16 %v308
      %v341 = vunpack.c.l.b16 %v309
      %v342 = vunpack.c.l.b16 %v310
      %v343 = vunpack.c.l.b16 %v311
      %v344 = vunpack.c.l.b16 %v312
      %v345 = vunpack.c.l.b16 %v313
      %v346 = vunpack.c.l.b16 %v314
      %v347 = vunpack.c.l.b16 %v315
      %v348 = vunpack.c.l.b16 %v316
      %v349 = vunpack.c.l.b16 %v317
      %v350 = vpack.c.b16 %v335, %v334
      %v351 = vpack.c.b16 %v337, %v336
      %v352 = vpack.c.b16 %v339, %v338
      %v353 = vpack.c.b16 %v341, %v340
      %v354 = vpack.c.b16 %v343, %v342
      %v355 = vpack.c.b16 %v345, %v344
      %v356 = vpack.c.b16 %v347, %v346
      %v357 = vpack.c.b16 %v349, %v348
      %366 = vmatprep.subr.bf16.mxu0 0
      %367 = vmatpush1.bf16.msra.mxu0 %v350
      %368 = vmatprep.subr.bf16.mxu0 0
      %369 = vmatpush1.bf16.msra.mxu0 %v351
      %370 = vmatprep.subr.bf16.mxu0 0
      %371 = vmatpush1.bf16.msra.mxu0 %v352
      %372 = vmatprep.subr.bf16.mxu0 0
      %373 = vmatpush1.bf16.msra.mxu0 %v353
      %374 = vmatprep.subr.bf16.mxu0 0
      %375 = vmatpush1.bf16.msra.mxu0 %v354
      %376 = vmatprep.subr.bf16.mxu0 0
      %377 = vmatpush1.bf16.msra.mxu0 %v355
      %378 = vmatprep.subr.bf16.mxu0 0
      %379 = vmatpush1.bf16.msra.mxu0 %v356
      %380 = vmatprep.subr.bf16.mxu0 0
      %381 = vmatpush1.bf16.msra.mxu0 %v357
      %382 = vmatprep.subr.bf16.mxu0 0
      %383 = vmatpush1.bf16.msra.mxu0 0
      %384 = vmatprep.subr.bf16.mxu0 0
      %385 = vmatpush1.bf16.msra.mxu0 0
      %386 = vmatprep.subr.bf16.mxu0 0
      %387 = vmatpush1.bf16.msra.mxu0 0
      %388 = vmatprep.subr.bf16.mxu0 0
      %389 = vmatpush1.bf16.msra.mxu0 0
      %390 = vmatprep.subr.bf16.mxu0 0
      %391 = vmatpush1.bf16.msra.mxu0 0
      %392 = vmatprep.subr.bf16.mxu0 0
      %393 = vmatpush1.bf16.msra.mxu0 0
      %394 = vmatprep.subr.bf16.mxu0 0
      %395 = vmatpush1.bf16.msra.mxu0 0
      %396 = vmatprep.subr.bf16.mxu0 0
      %397 = vmatpush1.bf16.msra.mxu0 0
      %398 = vmatprep.mubr.bf16.mxu0 0
      %399 = vmatmul.mubr.bf16.gmra.mrb[0].mxu0 %v300
      %v400 = vpop.f32.mrb[0].mxu0
      %v401 = vadd.f32 0.0, %v400
      %v402 = vpop.f32.mrb[0].mxu0
      %v403 = vpop.f32.mrb[0].mxu0
      %v404 = vpop.f32.mrb[0].mxu0
      %405 = vdwg.mxu0
      %v422 = vunpack.c.l.b16 %v283
      %v423 = vunpack.c.l.b16 %v284
      %v424 = vunpack.c.l.b16 %v285
      %v425 = vunpack.c.l.b16 %v286
      %v426 = vunpack.c.l.b16 %v287
      %v427 = vunpack.c.l.b16 %v288
      %v428 = vunpack.c.l.b16 %v289
      %v429 = vunpack.c.l.b16 %v290
      %v430 = vunpack.c.l.b16 %v291
      %v431 = vunpack.c.l.b16 %v292
      %v432 = vunpack.c.l.b16 %v293
      %v433 = vunpack.c.l.b16 %v294
      %v434 = vunpack.c.l.b16 %v295
      %v435 = vunpack.c.l.b16 %v296
      %v436 = vunpack.c.l.b16 %v297
      %v437 = vunpack.c.l.b16 %v298
      %v438 = vpack.c.b16 %v423, %v422
      %v439 = vpack.c.b16 %v425, %v424
      %v440 = vpack.c.b16 %v427, %v426
      %v441 = vpack.c.b16 %v429, %v428
      %v442 = vpack.c.b16 %v431, %v430
      %v443 = vpack.c.b16 %v433, %v432
      %v444 = vpack.c.b16 %v435, %v434
      %v445 = vpack.c.b16 %v437, %v436
      %454 = vmatprep.subr.bf16.mxu0 0
      %455 = vmatpush1.bf16.msra.mxu0 %v438
      %456 = vmatprep.subr.bf16.mxu0 0
      %457 = vmatpush1.bf16.msra.mxu0 %v439
      %458 = vmatprep.subr.bf16.mxu0 0
      %459 = vmatpush1.bf16.msra.mxu0 %v440
      %460 = vmatprep.subr.bf16.mxu0 0
      %461 = vmatpush1.bf16.msra.mxu0 %v441
      %462 = vmatprep.subr.bf16.mxu0 0
      %463 = vmatpush1.bf16.msra.mxu0 %v442
      %464 = vmatprep.subr.bf16.mxu0 0
      %465 = vmatpush1.bf16.msra.mxu0 %v443
      %466 = vmatprep.subr.bf16.mxu0 0
      %467 = vmatpush1.bf16.msra.mxu0 %v444
      %468 = vmatprep.subr.bf16.mxu0 0
      %469 = vmatpush1.bf16.msra.mxu0 %v445
      %470 = vmatprep.subr.bf16.mxu0 0
      %471 = vmatpush1.bf16.msra.mxu0 0
      %472 = vmatprep.subr.bf16.mxu0 0
      %473 = vmatpush1.bf16.msra.mxu0 0
      %474 = vmatprep.subr.bf16.mxu0 0
      %475 = vmatpush1.bf16.msra.mxu0 0
      %476 = vmatprep.subr.bf16.mxu0 0
      %477 = vmatpush1.bf16.msra.mxu0 0
      %478 = vmatprep.subr.bf16.mxu0 0
      %479 = vmatpush1.bf16.msra.mxu0 0
      %480 = vmatprep.subr.bf16.mxu0 0
      %481 = vmatpush1.bf16.msra.mxu0 0
      %482 = vmatprep.subr.bf16.mxu0 0
      %483 = vmatpush1.bf16.msra.mxu0 0
      %484 = vmatprep.subr.bf16.mxu0 0
      %485 = vmatpush1.bf16.msra.mxu0 0
      %486 = vmatprep.mubr.bf16.mxu0 0
      %487 = vmatmul.mubr.bf16.gmra.mrb[0].mxu0 %v282
      %v488 = vpop.f32.mrb[0].mxu0
      %v489 = vadd.f32 %v401, %v488
      %v490 = vpop.f32.mrb[0].mxu0
      %v491 = vpop.f32.mrb[0].mxu0
      %v492 = vpop.f32.mrb[0].mxu0
      %493 = vdwg.mxu0
      %v494 = vld [vmem:[%s264] sm:$0xf]
      %v495 = vld [vmem:[%s264 + $0x4] sm:$0x1]
      %s496 = scalar_lea.vmem %s1, 128
      %v497 = vld [vmem:[%s496] sm:$0xf]
      %v498 = vld [vmem:[%s496 + $0x4] sm:$0xf]
      %v499 = vld [vmem:[%s496 + $0x8] sm:$0xf]
      %v500 = vld [vmem:[%s496 + $0xc] sm:$0xf]
      %v501 = vld [vmem:[%s496 + $0x10] sm:$0xf]
      %v502 = vld [vmem:[%s496 + $0x14] sm:$0xf]
      %v503 = vld [vmem:[%s496 + $0x18] sm:$0xf]
      %v504 = vld [vmem:[%s496 + $0x1c] sm:$0xf]
      %v505 = vld [vmem:[%s496 + $0x20] sm:$0xf]
      %v506 = vld [vmem:[%s496 + $0x24] sm:$0xf]
      %v507 = vld [vmem:[%s496 + $0x28] sm:$0xf]
      %v508 = vld [vmem:[%s496 + $0x2c] sm:$0xf]
      %v509 = vld [vmem:[%s496 + $0x30] sm:$0xf]
      %v510 = vld [vmem:[%s496 + $0x34] sm:$0xf]
      %v511 = vld [vmem:[%s496 + $0x38] sm:$0xf]
      %v512 = vld [vmem:[%s496 + $0x3c] sm:$0xf]
      %v515 = vunpack.c.l.b16 %v494
      %v516 = vunpack.c.l.b16 %v495
      %v517 = vpack.c.b16 %v516, %v515
      %v519 = vshrl.u32 %v517, 16
      %v521 = vshll.u32 %v517, 16
      %v523 = vrot.slane %v521, 1
      %v524 = vor.u32 %v519, %v523
      %v542 = vunpack.c.l.b16 %v497
      %v543 = vunpack.c.l.b16 %v498
      %v544 = vunpack.c.l.b16 %v499
      %v545 = vunpack.c.l.b16 %v500
      %v546 = vunpack.c.l.b16 %v501
      %v547 = vunpack.c.l.b16 %v502
      %v548 = vunpack.c.l.b16 %v503
      %v549 = vunpack.c.l.b16 %v504
      %v550 = vunpack.c.l.b16 %v505
      %v551 = vunpack.c.l.b16 %v506
      %v552 = vunpack.c.l.b16 %v507
      %v553 = vunpack.c.l.b16 %v508
      %v554 = vunpack.c.l.b16 %v509
      %v555 = vunpack.c.l.b16 %v510
      %v556 = vunpack.c.l.b16 %v511
      %v557 = vunpack.c.l.b16 %v512
      %v558 = vpack.c.b16 %v543, %v542
      %v559 = vpack.c.b16 %v545, %v544
      %v560 = vpack.c.b16 %v547, %v546
      %v561 = vpack.c.b16 %v549, %v548
      %v562 = vpack.c.b16 %v551, %v550
      %v563 = vpack.c.b16 %v553, %v552
      %v564 = vpack.c.b16 %v555, %v554
      %v565 = vpack.c.b16 %v557, %v556
      %574 = vmatprep.subr.bf16.mxu0 0
      %575 = vmatpush1.bf16.msra.mxu0 %v558
      %576 = vmatprep.subr.bf16.mxu0 0
      %577 = vmatpush1.bf16.msra.mxu0 %v559
      %578 = vmatprep.subr.bf16.mxu0 0
      %579 = vmatpush1.bf16.msra.mxu0 %v560
      %580 = vmatprep.subr.bf16.mxu0 0
      %581 = vmatpush1.bf16.msra.mxu0 %v561
      %582 = vmatprep.subr.bf16.mxu0 0
      %583 = vmatpush1.bf16.msra.mxu0 %v562
      %584 = vmatprep.subr.bf16.mxu0 0
      %585 = vmatpush1.bf16.msra.mxu0 %v563
      %586 = vmatprep.subr.bf16.mxu0 0
      %587 = vmatpush1.bf16.msra.mxu0 %v564
      %588 = vmatprep.subr.bf16.mxu0 0
      %589 = vmatpush1.bf16.msra.mxu0 %v565
      %590 = vmatprep.subr.bf16.mxu0 0
      %591 = vmatpush1.bf16.msra.mxu0 0
      %592 = vmatprep.subr.bf16.mxu0 0
      %593 = vmatpush1.bf16.msra.mxu0 0
      %594 = vmatprep.subr.bf16.mxu0 0
      %595 = vmatpush1.bf16.msra.mxu0 0
      %596 = vmatprep.subr.bf16.mxu0 0
      %597 = vmatpush1.bf16.msra.mxu0 0
      %598 = vmatprep.subr.bf16.mxu0 0
      %599 = vmatpush1.bf16.msra.mxu0 0
      %600 = vmatprep.subr.bf16.mxu0 0
      %601 = vmatpush1.bf16.msra.mxu0 0
      %602 = vmatprep.subr.bf16.mxu0 0
      %603 = vmatpush1.bf16.msra.mxu0 0
      %604 = vmatprep.subr.bf16.mxu0 0
      %605 = vmatpush1.bf16.msra.mxu0 0
      %606 = vmatprep.mubr.bf16.mxu0 0
      %607 = vmatmul.mubr.bf16.gmra.mrb[0].mxu0 %v524
      %v608 = vpop.f32.mrb[0].mxu0
      %v609 = vadd.f32 0.0, %v608
      %v610 = vpop.f32.mrb[0].mxu0
      %v611 = vpop.f32.mrb[0].mxu0
      %v612 = vpop.f32.mrb[0].mxu0
      %613 = vdwg.mxu0
      %v614 = vadd.f32 %v489, %v609
      %v615 = vpack.c.bf16 %v614, %v614
      %616 = vst [vmem:[%s268] sm:$0xf] %v615
      %v617 = vrot.slane %v614, 4
      %v618 = vadd.f32 %v614, %v617
      %v619 = vrot.slane %v618, 2
      %v620 = vadd.f32 %v618, %v619
      %v621 = vrot.slane %v620, 1
      %v622 = vadd.f32 %v620, %v621
      %v623 = vmul.f32 %v614, %v614
      %v624 = vrot.slane %v623, 4
      %v625 = vadd.f32 %v623, %v624
      %v626 = vrot.slane %v625, 2
      %v627 = vadd.f32 %v625, %v626
      %v628 = vrot.slane %v627, 1
      %v629 = vadd.f32 %v627, %v628
      %vm630 = vcmask 1040384
      %v631 = vsel %vm630, %v622, %v629
      %632 = vst [vmem:[%s272] sm:$0x3] %v631
      %v633 = vld [vmem:[%s2] sm:$0xf]
      %v634 = vld [vmem:[%s2 + $0x4] sm:$0xf]
      %v635 = vld [vmem:[%s2 + $0x8] sm:$0xf]
      %v636 = vld [vmem:[%s2 + $0xc] sm:$0xf]
      %v637 = vld [vmem:[%s2 + $0x10] sm:$0xf]
      %v638 = vld [vmem:[%s2 + $0x14] sm:$0xf]
      %v639 = vld [vmem:[%s2 + $0x18] sm:$0xf]
      %v640 = vld [vmem:[%s2 + $0x1c] sm:$0xf]
      %v641 = vld [vmem:[%s2 + $0x20] sm:$0xf]
      %v642 = vld [vmem:[%s2 + $0x24] sm:$0xf]
      %v643 = vld [vmem:[%s2 + $0x28] sm:$0xf]
      %v644 = vld [vmem:[%s2 + $0x2c] sm:$0xf]
      %v645 = vld [vmem:[%s2 + $0x30] sm:$0xf]
      %v646 = vld [vmem:[%s2 + $0x34] sm:$0xf]
      %v647 = vld [vmem:[%s2 + $0x38] sm:$0xf]
      %v648 = vld [vmem:[%s2 + $0x3c] sm:$0xf]
      %v665 = vunpack.c.l.b16 %v633
      %v666 = vunpack.c.l.b16 %v634
      %v667 = vunpack.c.l.b16 %v635
      %v668 = vunpack.c.l.b16 %v636
      %v669 = vunpack.c.l.b16 %v637
      %v670 = vunpack.c.l.b16 %v638
      %v671 = vunpack.c.l.b16 %v639
      %v672 = vunpack.c.l.b16 %v640
      %v673 = vunpack.c.l.b16 %v641
      %v674 = vunpack.c.l.b16 %v642
      %v675 = vunpack.c.l.b16 %v643
      %v676 = vunpack.c.l.b16 %v644
      %v677 = vunpack.c.l.b16 %v645
      %v678 = vunpack.c.l.b16 %v646
      %v679 = vunpack.c.l.b16 %v647
      %v680 = vunpack.c.l.b16 %v648
      %v681 = vpack.c.b16 %v666, %v665
      %v682 = vpack.c.b16 %v668, %v667
      %v683 = vpack.c.b16 %v670, %v669
      %v684 = vpack.c.b16 %v672, %v671
      %v685 = vpack.c.b16 %v674, %v673
      %v686 = vpack.c.b16 %v676, %v675
      %v687 = vpack.c.b16 %v678, %v677
      %v688 = vpack.c.b16 %v680, %v679
      %697 = vmatprep.subr.bf16.mxu0 0
      %698 = vmatpush1.bf16.msra.mxu0 %v681
      %699 = vmatprep.subr.bf16.mxu0 0
      %700 = vmatpush1.bf16.msra.mxu0 %v682
      %701 = vmatprep.subr.bf16.mxu0 0
      %702 = vmatpush1.bf16.msra.mxu0 %v683
      %703 = vmatprep.subr.bf16.mxu0 0
      %704 = vmatpush1.bf16.msra.mxu0 %v684
      %705 = vmatprep.subr.bf16.mxu0 0
      %706 = vmatpush1.bf16.msra.mxu0 %v685
      %707 = vmatprep.subr.bf16.mxu0 0
      %708 = vmatpush1.bf16.msra.mxu0 %v686
      %709 = vmatprep.subr.bf16.mxu0 0
      %710 = vmatpush1.bf16.msra.mxu0 %v687
      %711 = vmatprep.subr.bf16.mxu0 0
      %712 = vmatpush1.bf16.msra.mxu0 %v688
      %713 = vmatprep.subr.bf16.mxu0 0
      %714 = vmatpush1.bf16.msra.mxu0 0
      %715 = vmatprep.subr.bf16.mxu0 0
      %716 = vmatpush1.bf16.msra.mxu0 0
      %717 = vmatprep.subr.bf16.mxu0 0
      %718 = vmatpush1.bf16.msra.mxu0 0
      %719 = vmatprep.subr.bf16.mxu0 0
      %720 = vmatpush1.bf16.msra.mxu0 0
      %721 = vmatprep.subr.bf16.mxu0 0
      %722 = vmatpush1.bf16.msra.mxu0 0
      %723 = vmatprep.subr.bf16.mxu0 0
      %724 = vmatpush1.bf16.msra.mxu0 0
      %725 = vmatprep.subr.bf16.mxu0 0
      %726 = vmatpush1.bf16.msra.mxu0 0
      %727 = vmatprep.subr.bf16.mxu0 0
      %728 = vmatpush1.bf16.msra.mxu0 0
      %729 = vmatprep.mubr.bf16.mxu0 0
      %730 = vmatmul.mubr.bf16.gmra.mrb[0].mxu0 %v300
      %v731 = vpop.f32.mrb[0].mxu0
      %v732 = vadd.f32 0.0, %v731
      %v733 = vpop.f32.mrb[0].mxu0
      %v734 = vpop.f32.mrb[0].mxu0
      %v735 = vpop.f32.mrb[0].mxu0
      %736 = vdwg.mxu0
      %v737 = vpack.c.bf16 %v732, %v732
      %738 = vst [vmem:[%s276] sm:$0xf] %v737
      %v739 = vrot.slane %v732, 4
      %v740 = vadd.f32 %v732, %v739
      %v741 = vrot.slane %v740, 2
      %v742 = vadd.f32 %v740, %v741
      %v743 = vrot.slane %v742, 1
      %v744 = vadd.f32 %v742, %v743
      %v745 = vmul.f32 %v732, %v732
      %v746 = vrot.slane %v745, 4
      %v747 = vadd.f32 %v745, %v746
      %v748 = vrot.slane %v747, 2
      %v749 = vadd.f32 %v747, %v748
      %v750 = vrot.slane %v749, 1
      %v751 = vadd.f32 %v749, %v750
      %v752 = vsel %vm630, %v744, %v751
      %753 = vst [vmem:[%s280] sm:$0x3] %v752
      %p754 = scmp.lt.s32.totalorder %s18, 1
      %s755 = scalar_select %p754, %s18, 1
      %s756 = smul.addr %s755, 4
      %s757 = scalar_lea.vmem %s3, %s756
      %p758 = scmp.lt.s32.totalorder %s18, 1
      %s759 = scalar_select %p758, %s18, 1
      %s760 = smul.addr %s759, 2
      %s761 = scalar_lea.vmem %s4, %s760
      %p762 = scmp.lt.s32.totalorder %s18, 1
      %s763 = scalar_select %p762, %s18, 1
      %s764 = smul.addr %s763, 4
      %s765 = scalar_lea.vmem %s5, %s764
      %p766 = scmp.lt.s32.totalorder %s18, 1
      %s767 = scalar_select %p766, %s18, 1
      %s768 = smul.addr %s767, 2
      %s769 = scalar_lea.vmem %s6, %s768
      // Predicated region
      $region33: #{basic_block_forward.3} parent=31 // pred_check
        %p770 = pneg %p104
      $region34: #{basic_block_forward.3} parent=31 // pred_check_branch
        %772 = sbr.rel (%p770) target = $region36
      $region35: #{basic_block_forward.3} parent=31 // pred_region
        _
      $region36: #{basic_block_forward.3} parent=31 // pred_fallthru
        _
      // Predicated region
      $region37: #{basic_block_forward.3} parent=31 // pred_check
        %p773 = pneg %p130
      $region38: #{basic_block_forward.3} parent=31 // pred_check_branch
        %775 = sbr.rel (%p773) target = $region40
      $region39: #{basic_block_forward.3} parent=31 // pred_region
        _
      $region40: #{basic_block_forward.3} parent=31 // pred_fallthru
        _
      // Predicated region
      $region41: #{basic_block_forward.3} parent=31 // pred_check
        %p776 = pneg %p156
      $region42: #{basic_block_forward.3} parent=31 // pred_check_branch
        %778 = sbr.rel (%p776) target = $region44
      $region43: #{basic_block_forward.3} parent=31 // pred_region
        _
      $region44: #{basic_block_forward.3} parent=31 // pred_fallthru
        _
      // Predicated region
      $region45: #{basic_block_forward.3} parent=31 // pred_check
        %p779 = pneg %p182
      $region46: #{basic_block_forward.3} parent=31 // pred_check_branch
        %781 = sbr.rel (%p779) target = $region48
      $region47: #{basic_block_forward.3} parent=31 // pred_region
        _
      $region48: #{basic_block_forward.3} parent=31 // pred_fallthru
        _
    $region32: #{basic_block_forward.3} parent=5 // pred_fallthru
      _
    %p782 = scmp.le.s32.totalorder 2, %s13
    // Predicated region
    $region49: #{basic_block_forward.3} parent=5 // pred_check
      %p783 = pneg %p782
    $region50: #{basic_block_forward.3} parent=5 // pred_check_branch
      %785 = sbr.rel (%p783) target = $region52
    $region51: #{basic_block_forward.3} parent=5 // pred_region
      %s786 = ssub.s32 %s13, 2
      // Predicated region
      $region53: #{basic_block_forward.3} parent=51 // pred_check
        %p787 = pneg %p110
      $region54: #{basic_block_forward.3} parent=51 // pred_check_branch
        %789 = sbr.rel (%p787) target = $region56
      $region55: #{basic_block_forward.3} parent=51 // pred_region
        %p790 = scmp.lt.s32.totalorder %s19, 1
        %s791 = scalar_select %p790, %s19, 1
        %s792 = smul.addr %s791, 4
        %s793 = scalar_lea.vmem %s3, %s792
      $region56: #{basic_block_forward.3} parent=51 // pred_fallthru
        _
      // Predicated region
      $region57: #{basic_block_forward.3} parent=51 // pred_check
        %p794 = pneg %p136
      $region58: #{basic_block_forward.3} parent=51 // pred_check_branch
        %796 = sbr.rel (%p794) target = $region60
      $region59: #{basic_block_forward.3} parent=51 // pred_region
        %p797 = scmp.lt.s32.totalorder %s19, 1
        %s798 = scalar_select %p797, %s19, 1
        %s799 = smul.addr %s798, 2
        %s800 = scalar_lea.vmem %s4, %s799
      $region60: #{basic_block_forward.3} parent=51 // pred_fallthru
        _
      // Predicated region
      $region61: #{basic_block_forward.3} parent=51 // pred_check
        %p801 = pneg %p162
      $region62: #{basic_block_forward.3} parent=51 // pred_check_branch
        %803 = sbr.rel (%p801) target = $region64
      $region63: #{basic_block_forward.3} parent=51 // pred_region
        %p804 = scmp.lt.s32.totalorder %s19, 1
        %s805 = scalar_select %p804, %s19, 1
        %s806 = smul.addr %s805, 4
        %s807 = scalar_lea.vmem %s5, %s806
      $region64: #{basic_block_forward.3} parent=51 // pred_fallthru
        _
      // Predicated region
      $region65: #{basic_block_forward.3} parent=51 // pred_check
        %p808 = pneg %p188
      $region66: #{basic_block_forward.3} parent=51 // pred_check_branch
        %810 = sbr.rel (%p808) target = $region68
      $region67: #{basic_block_forward.3} parent=51 // pred_region
        %p811 = scmp.lt.s32.totalorder %s19, 1
        %s812 = scalar_select %p811, %s19, 1
        %s813 = smul.addr %s812, 2
        %s814 = scalar_lea.vmem %s6, %s813
      $region68: #{basic_block_forward.3} parent=51 // pred_fallthru
        _
    $region52: #{basic_block_forward.3} parent=5 // pred_fallthru
      _
  $region6: #{basic_block_forward.3} parent=0 // loop_footer
    %s17 = sadd.s32 1, %s13
  $region7: #{basic_block_forward.3} parent=0 // loop_footer_branch
    %12 = sbr.rel target = $region3
  $region8: #{basic_block_forward.3} parent=0 // loop_exit
    _

</llo_original>
